<compile_context>
chip_gen: v7x
topology: tpu7x:2x2x1
jax: 0.10.0
libtpu: 0.0.40
codegen_flags: <defaults>
</compile_context>

<pallas_src>
import math
import functools

import numpy as np
import jax
import jax.numpy as jnp
from jax import lax
from jax.experimental import pallas as pl
from jax.experimental.pallas import tpu as pltpu


# ----------------------------------------------------------------------------
# Kernel: one transformer block for one batch element / one layer per grid step
# ----------------------------------------------------------------------------
def block_kernel(x_ref, cos_ref, sine_ref, sino_ref,
                 anw_ref, fnw_ref,
                 wqkv_ref, wo_ref, w1_ref, w2_ref,
                 o_ref, attn_buf,
                 *, n_heads, head_dim, eps):
    layer = pl.program_id(1)

    # Layer 0: seed the resident activation from the input tile.  For l > 0
    # the activation lives in the resident output block (accumulator pattern).
    @pl.when(layer == 0)
    def _():
        o_ref[...] = x_ref[...]

    x = o_ref[...]                                     # (S, D) float32
    D = x.shape[-1]

    def rmsnorm(v, w):                                 # w: (1, D), f32 math
        ms = jnp.mean(v * v, axis=-1, keepdims=True)
        return v * lax.rsqrt(ms + eps) * w

    def bf16_dot(a, b_bf16):                           # MXU: bf16 in, f32 acc
        return jnp.dot(a.astype(jnp.bfloat16), b_bf16,
                       preferred_element_type=jnp.float32)

    # Lane shifts (XLU/VPU) delivering each interleaved RoPE pair's partner.
    def shift_left(t):     # out[:, j] = t[:, j + 1]; last col is masked below
        return jnp.concatenate([t[:, 1:], jnp.zeros_like(t[:, :1])], axis=1)

    def shift_right(t):    # out[:, j] = t[:, j - 1]; first col is masked below
        return jnp.concatenate([jnp.zeros_like(t[:, :1]), t[:, :-1]], axis=1)

    def rope(t):           # t and tables are (S, 2*D); matmul-free rotation
        return (t * cos_ref[...]
                + shift_left(t) * sine_ref[...]       # even lanes: -sin * pair
                + shift_right(t) * sino_ref[...])     # odd lanes:  +sin * pair

    # ---- attention sub-block -------------------------------------------------
    h = rmsnorm(x, anw_ref[...])
    qkv = bf16_dot(h, wqkv_ref[...])                   # (S, 3D) f32, fused QKV
    qk = rope(qkv[:, :2 * D])                          # RoPE on q and k at once
    q, k, v = qk[:, :D], qk[:, D:], qkv[:, 2 * D:]

    scale = 1.0 / math.sqrt(head_dim)
    for hh in range(n_heads):                          # static unroll over heads
        lo = hh * head_dim
        qh = q[:, lo:lo + head_dim].astype(jnp.bfloat16)
        kh = k[:, lo:lo + head_dim].astype(jnp.bfloat16)
        vh = v[:, lo:lo + head_dim].astype(jnp.bfloat16)
        s = lax.dot_general(qh, kh, (((1,), (1,)), ((), ())),
                            preferred_element_type=jnp.float32) * scale
        s = s - jnp.max(s, axis=-1, keepdims=True)
        p = jnp.exp(s)
        p = p * pl.reciprocal(jnp.sum(p, axis=-1, keepdims=True), approx=True)
        # Write this head's output into the VMEM scratch (no lane concatenate).
        attn_buf[:, lo:lo + head_dim] = jnp.dot(
            p.astype(jnp.bfloat16), vh, preferred_element_type=jnp.float32)

    x = x + bf16_dot(attn_buf[...], wo_ref[...])       # single full-width Wo

    # ---- FFN sub-block --------------------------------------------------------
    h2 = rmsnorm(x, fnw_ref[...])
    u = bf16_dot(h2, w1_ref[...])
    u = u * jax.nn.sigmoid(u)                          # SiLU in f32
    o_ref[...] = x + bf16_dot(u, w2_ref[...])


# ----------------------------------------------------------------------------
# Wrapper: whole transformer in one pallas_call, grid = (batch, layers)
# ----------------------------------------------------------------------------
def base_transformer_forward(x, params, cos2, sin_even2, sin_odd2, *, n_heads):
    B, S, D = x.shape
    L = params["wqkv"].shape[0]
    hidden = params["w1"].shape[-1]
    head_dim = D // n_heads
    kern = functools.partial(block_kernel, n_heads=n_heads,
                             head_dim=head_dim, eps=1e-6)

    def const_spec(shape):                 # shared tables, never re-fetched
        nd = len(shape)
        return pl.BlockSpec(tuple(shape), lambda b, l, _nd=nd: (0,) * _nd)

    def layer_spec(shape):                 # (L, ...) stacked weights, by layer
        nd = len(shape)
        return pl.BlockSpec((pl.Squeezed(),) + tuple(shape),
                            lambda b, l, _nd=nd: (l,) + (0,) * _nd)

    in_act_spec = pl.BlockSpec((pl.Squeezed(), S, D), lambda b, l: (b, 0, 0))
    out_act_spec = pl.BlockSpec((pl.Squeezed(), S, D), lambda b, l: (b, 0, 0))

    return pl.pallas_call(
        kern,
        out_shape=jax.ShapeDtypeStruct((B, S, D), x.dtype),
        grid=(B, L),
        in_specs=[
            in_act_spec,                    # x (read only at layer 0)
            const_spec((S, 2 * D)),         # cos table (q|k slab)
            const_spec((S, 2 * D)),         # -sin, nonzero on even lanes
            const_spec((S, 2 * D)),         # +sin, nonzero on odd lanes
            layer_spec((1, D)),             # attn_norm weight   (f32)
            layer_spec((1, D)),             # ffn_norm weight    (f32)
            layer_spec((D, 3 * D)),         # fused Wqkv^T       (bf16)
            layer_spec((D, D)),             # Wo^T               (bf16)
            layer_spec((D, hidden)),        # W1^T               (bf16)
            layer_spec((hidden, D)),        # W2^T               (bf16)
        ],
        out_specs=out_act_spec,
        scratch_shapes=[pltpu.VMEM((S, D), jnp.float32)],   # per-head attn out
        compiler_params=pltpu.CompilerParams(
            dimension_semantics=("parallel", "arbitrary"),
            vmem_limit_bytes=64 * 1024 * 1024),
    )(x, cos2, sin_even2, sin_odd2,
      params["attn_norm_w"], params["ffn_norm_w"],
      params["wqkv"], params["wo"], params["w1"], params["w2"])


# ----------------------------------------------------------------------------
# Parameter / RoPE-table construction (plain JAX / numpy glue)
# ----------------------------------------------------------------------------
def init_params(key, dim, n_layers, hidden_factor=4):
    hidden = int(dim * hidden_factor)
    scale = 1.0 / math.sqrt(dim)
    wqkv, wo, w1, w2 = [], [], [], []
    for _ in range(n_layers):
        key, kq, kk, kv, ko, k1, k2 = jax.random.split(key, 7)
        wq_t = jax.random.normal(kq, (dim, dim), jnp.float32) * scale
        wk_t = jax.random.normal(kk, (dim, dim), jnp.float32) * scale
        wv_t = jax.random.normal(kv, (dim, dim), jnp.float32) * scale
        wqkv.append(jnp.concatenate([wq_t, wk_t, wv_t], axis=1))
        wo.append(jax.random.normal(ko, (dim, dim), jnp.float32) * scale)
        w1.append(jax.random.normal(k1, (dim, hidden), jnp.float32) * scale)
        w2.append(jax.random.normal(k2, (hidden, dim), jnp.float32) * scale)
    bf16 = jnp.bfloat16
    params = {
        "wqkv": jnp.stack(wqkv).astype(bf16),             # (L, D, 3D)
        "wo": jnp.stack(wo).astype(bf16),                 # (L, D, D)
        "w1": jnp.stack(w1).astype(bf16),                 # (L, D, hidden)
        "w2": jnp.stack(w2).astype(bf16),                 # (L, hidden, D)
        "attn_norm_w": jnp.ones((n_layers, 1, dim), jnp.float32),
        "ffn_norm_w": jnp.ones((n_layers, 1, dim), jnp.float32),
    }
    return params, key


def make_rope_tables(head_dim, n_heads, seqlen, max_seqlen, theta=10000.0):
    """cos / masked-sin tables of width 2*D (covering the [q | k] slab)."""
    freqs = 1.0 / theta ** (np.arange(0, head_dim, 2, dtype=np.float32) / head_dim)
    t = np.arange(max_seqlen, dtype=np.float32)
    f = np.outer(t, freqs)[:seqlen]                       # (S, head_dim//2)
    cos_p, sin_p = np.cos(f), np.sin(f)
    cos_row = np.tile(np.repeat(cos_p, 2, axis=1), (1, 2 * n_heads))  # (S, 2D)
    sin_row = np.tile(np.repeat(sin_p, 2, axis=1), (1, 2 * n_heads))
    even = (np.arange(cos_row.shape[1]) % 2 == 0)[None, :]
    sin_even = np.where(even, -sin_row, 0.0).astype(np.float32)  # for shift_left
    sin_odd = np.where(even, 0.0, sin_row).astype(np.float32)    # for shift_right
    return (jnp.asarray(cos_row.astype(np.float32)), jnp.asarray(sin_even),
            jnp.asarray(sin_odd), jnp.asarray(cos_p), jnp.asarray(sin_p))


# ----------------------------------------------------------------------------
# Pure-JAX reference mirroring the PyTorch module (same bf16-matmul precision)
# ----------------------------------------------------------------------------
def reference_forward(x, params, cos_p, sin_p, n_heads, eps=1e-6):
    B, S, D = x.shape
    hd = D // n_heads
    L = params["wqkv"].shape[0]
    bf16 = jnp.bfloat16

    def bdot(a, w):
        return jnp.dot(a.astype(bf16), w, preferred_element_type=jnp.float32)

    def rms(v, w):
        return v * lax.rsqrt(jnp.mean(v * v, -1, keepdims=True) + eps) * w

    def rope(t):                                          # (B,S,H,hd) complex
        tr = t.reshape(B, S, n_heads, hd // 2, 2)
        re, im = tr[..., 0], tr[..., 1]
        c = cos_p[None, :, None, :]
        s = sin_p[None, :, None, :]
        return jnp.stack([re * c - im * s, re * s + im * c],
                         axis=-1).reshape(B, S, n_heads, hd)

    for l in range(L):
        h = rms(x, params["attn_norm_w"][l].reshape(-1))
        qkv = bdot(h, params["wqkv"][l])
        q = rope(qkv[..., :D].reshape(B, S, n_heads, hd))
        k = rope(qkv[..., D:2 * D].reshape(B, S, n_heads, hd))
        v = qkv[..., 2 * D:].reshape(B, S, n_heads, hd)
        q, k, v = (jnp.moveaxis(t, 1, 2) for t in (q, k, v))   # (B,H,S,hd)
        sc = jnp.einsum("bhqd,bhkd->bhqk", q.astype(bf16), k.astype(bf16),
                        preferred_element_type=jnp.float32) / math.sqrt(hd)
        at = jax.nn.softmax(sc, axis=-1)
        out = jnp.einsum("bhqk,bhkd->bhqd", at.astype(bf16), v.astype(bf16),
                         preferred_element_type=jnp.float32)
        out = jnp.moveaxis(out, 1, 2).reshape(B, S, D)
        x = x + bdot(out, params["wo"][l])
        h2 = rms(x, params["ffn_norm_w"][l].reshape(-1))
        u = bdot(h2, params["w1"][l])
        x = x + bdot(jax.nn.silu(u), params["w2"][l])
    return x


if __name__ == "__main__":
    B, S, D = 2, 8, 32
    n_heads, n_layers = 4, 2
    head_dim = D // n_heads
    max_seqlen, rope_theta = 16, 10000.0

    key = jax.random.PRNGKey(0)
    params, key = init_params(key, D, n_layers)
    x = jax.random.normal(key, (B, S, D), jnp.float32)

    cos2, sin_even2, sin_odd2, cos_p, sin_p = make_rope_tables(
        head_dim, n_heads, S, max_seqlen, rope_theta)

    fwd = jax.jit(functools.partial(base_transformer_forward, n_heads=n_heads))
    out = jax.block_until_ready(fwd(x, params, cos2, sin_even2, sin_odd2))

    ref = reference_forward(x, params, cos_p, sin_p, n_heads)
    assert out.shape == (B, S, D)
    assert jnp.allclose(out, ref, rtol=2e-2, atol=2e-2), "mismatch vs reference"

    print("KERNEL_OK")
</pallas_src>

<mosaic_0001>
module attributes {stable_mosaic.version = 11 : i64} {
  func.func @block_kernel(%arg0: i32, %arg1: i32, %arg2: memref<1x8x32xf32, #tpu.memory_space<vmem>>, %arg3: memref<8x64xf32, #tpu.memory_space<vmem>>, %arg4: memref<8x64xf32, #tpu.memory_space<vmem>>, %arg5: memref<8x64xf32, #tpu.memory_space<vmem>>, %arg6: memref<1x1x32xf32, #tpu.memory_space<vmem>>, %arg7: memref<1x1x32xf32, #tpu.memory_space<vmem>>, %arg8: memref<1x32x96xbf16, #tpu.memory_space<vmem>>, %arg9: memref<1x32x32xbf16, #tpu.memory_space<vmem>>, %arg10: memref<1x32x128xbf16, #tpu.memory_space<vmem>>, %arg11: memref<1x128x32xbf16, #tpu.memory_space<vmem>>, %arg12: memref<1x8x32xf32, #tpu.memory_space<vmem>>, %arg13: memref<8x32xf32, #tpu.memory_space<vmem>>) attributes {dimension_semantics = [#tpu.dimension_semantics<parallel>, #tpu.dimension_semantics<arbitrary>], iteration_bounds = array<i64: 2, 2>, scalar_prefetch = 0 : i64, scratch_operands = 1 : i64, tpu.core_type = #tpu.core_type<tc>, window_params = [{transform_indices = @transform_0, window_bounds = array<i64: 1, 8, 32>}, {pipeline_mode = #tpu.pipeline_mode<synchronous>, transform_indices = @transform_1, window_bounds = array<i64: 8, 64>}, {pipeline_mode = #tpu.pipeline_mode<synchronous>, transform_indices = @transform_2, window_bounds = array<i64: 8, 64>}, {pipeline_mode = #tpu.pipeline_mode<synchronous>, transform_indices = @transform_3, window_bounds = array<i64: 8, 64>}, {transform_indices = @transform_4, window_bounds = array<i64: 1, 1, 32>}, {transform_indices = @transform_5, window_bounds = array<i64: 1, 1, 32>}, {transform_indices = @transform_6, window_bounds = array<i64: 1, 32, 96>}, {transform_indices = @transform_7, window_bounds = array<i64: 1, 32, 32>}, {transform_indices = @transform_8, window_bounds = array<i64: 1, 32, 128>}, {transform_indices = @transform_9, window_bounds = array<i64: 1, 128, 32>}, {transform_indices = @transform_10, window_bounds = array<i64: 1, 8, 32>}]} {
    %c0_i32 = arith.constant 0 : i32
    %0 = arith.cmpi eq, %arg1, %c0_i32 : i32
    %1 = arith.extui %0 : i1 to i32
    %c0_i32_0 = arith.constant 0 : i32
    %2 = arith.cmpi ne, %1, %c0_i32_0 : i32
    scf.if %2 {
      %c0_69 = arith.constant 0 : index
      %c0_70 = arith.constant 0 : index
      %c0_71 = arith.constant 0 : index
      %167 = vector.load %arg2[%c0_69, %c0_70, %c0_71] : memref<1x8x32xf32, #tpu.memory_space<vmem>>, vector<1x8x32xf32>
      %168 = vector.shape_cast %167 : vector<1x8x32xf32> to vector<8x32xf32>
      %c0_72 = arith.constant 0 : index
      %c0_73 = arith.constant 0 : index
      %c0_74 = arith.constant 0 : index
      %169 = vector.load %arg12[%c0_72, %c0_73, %c0_74] : memref<1x8x32xf32, #tpu.memory_space<vmem>>, vector<1x8x32xf32>
      %170 = vector.shape_cast %169 : vector<1x8x32xf32> to vector<8x32xf32>
      %171 = vector.shape_cast %168 : vector<8x32xf32> to vector<1x8x32xf32>
      tpu.vector_store %arg12[%c0_72, %c0_73, %c0_74], %171 {strides = array<i32>} : memref<1x8x32xf32, #tpu.memory_space<vmem>>, vector<1x8x32xf32>,
    } else {
    }
    %c0 = arith.constant 0 : index
    %c0_1 = arith.constant 0 : index
    %c0_2 = arith.constant 0 : index
    %3 = vector.load %arg12[%c0, %c0_1, %c0_2] : memref<1x8x32xf32, #tpu.memory_space<vmem>>, vector<1x8x32xf32>
    %4 = vector.shape_cast %3 : vector<1x8x32xf32> to vector<8x32xf32>
    %c0_3 = arith.constant 0 : index
    %c0_4 = arith.constant 0 : index
    %c0_5 = arith.constant 0 : index
    %5 = vector.load %arg6[%c0_3, %c0_4, %c0_5] : memref<1x1x32xf32, #tpu.memory_space<vmem>>, vector<1x1x32xf32>
    %6 = vector.shape_cast %5 : vector<1x1x32xf32> to vector<1x32xf32>
    %7 = arith.mulf %4, %4 : vector<8x32xf32>
    %cst = arith.constant dense<0.000000e+00> : vector<8xf32>
    %8 = vector.multi_reduction <add>, %7, %cst [1] : vector<8x32xf32> to vector<8xf32>
    %9 = vector.shape_cast %8 : vector<8xf32> to vector<8x1xf32>
    %cst_6 = arith.constant 3.200000e+01 : f32
    %10 = vector.broadcast %cst_6 : f32 to vector<8x1xf32>
    %11 = arith.divf %9, %10 : vector<8x1xf32>
    %cst_7 = arith.constant 9.99999997E-7 : f32
    %12 = vector.broadcast %cst_7 : f32 to vector<8x1xf32>
    %13 = arith.addf %11, %12 : vector<8x1xf32>
    %14 = math.rsqrt %13 : vector<8x1xf32>
    %15 = vector.broadcast %14 : vector<8x1xf32> to vector<8x32xf32>
    %16 = arith.mulf %4, %15 : vector<8x32xf32>
    %17 = vector.broadcast %6 : vector<1x32xf32> to vector<8x32xf32>
    %18 = arith.mulf %16, %17 : vector<8x32xf32>
    %c0_8 = arith.constant 0 : index
    %c0_9 = arith.constant 0 : index
    %c0_10 = arith.constant 0 : index
    %19 = vector.load %arg8[%c0_8, %c0_9, %c0_10] : memref<1x32x96xbf16, #tpu.memory_space<vmem>>, vector<1x32x96xbf16>
    %20 = vector.shape_cast %19 : vector<1x32x96xbf16> to vector<32x96xbf16>
    %21 = arith.truncf %18 : vector<8x32xf32> to vector<8x32xbf16>
    %cst_11 = arith.constant dense<0.000000e+00> : vector<8x96xf32>
    %22 = tpu.matmul %21, %20, %cst_11 {dimension_numbers = #tpu.dot_dimension_numbers<[1], [0], [0], [1], [0, 0, 1, 1], [], []>} : vector<8x32xbf16>, vector<32x96xbf16>, vector<8x96xf32> -> vector<8x96xf32>
    %23 = vector.extract_strided_slice %22 {offsets = [0, 0], sizes = [8, 64], strides = [1, 1]} : vector<8x96xf32> to vector<8x64xf32>
    %c0_12 = arith.constant 0 : index
    %c0_13 = arith.constant 0 : index
    %24 = vector.load %arg3[%c0_12, %c0_13] : memref<8x64xf32, #tpu.memory_space<vmem>>, vector<8x64xf32>
    %25 = arith.mulf %23, %24 : vector<8x64xf32>
    %26 = vector.extract_strided_slice %23 {offsets = [0, 1], sizes = [8, 63], strides = [1, 1]} : vector<8x64xf32> to vector<8x63xf32>
    %cst_14 = arith.constant 0.000000e+00 : f32
    %27 = vector.broadcast %cst_14 : f32 to vector<8x1xf32>
    %28 = tpu.concatenate %26, %27 in 1 : vector<8x63xf32>, vector<8x1xf32> -> vector<8x64xf32>
    %c0_15 = arith.constant 0 : index
    %c0_16 = arith.constant 0 : index
    %29 = vector.load %arg4[%c0_15, %c0_16] : memref<8x64xf32, #tpu.memory_space<vmem>>, vector<8x64xf32>
    %30 = arith.mulf %28, %29 : vector<8x64xf32>
    %31 = arith.addf %25, %30 : vector<8x64xf32>
    %cst_17 = arith.constant 0.000000e+00 : f32
    %32 = vector.broadcast %cst_17 : f32 to vector<8x1xf32>
    %33 = vector.extract_strided_slice %23 {offsets = [0, 0], sizes = [8, 63], strides = [1, 1]} : vector<8x64xf32> to vector<8x63xf32>
    %34 = tpu.concatenate %32, %33 in 1 : vector<8x1xf32>, vector<8x63xf32> -> vector<8x64xf32>
    %c0_18 = arith.constant 0 : index
    %c0_19 = arith.constant 0 : index
    %35 = vector.load %arg5[%c0_18, %c0_19] : memref<8x64xf32, #tpu.memory_space<vmem>>, vector<8x64xf32>
    %36 = arith.mulf %34, %35 : vector<8x64xf32>
    %37 = arith.addf %31, %36 : vector<8x64xf32>
    %38 = vector.extract_strided_slice %37 {offsets = [0, 0], sizes = [8, 32], strides = [1, 1]} : vector<8x64xf32> to vector<8x32xf32>
    %39 = vector.extract_strided_slice %37 {offsets = [0, 32], sizes = [8, 32], strides = [1, 1]} : vector<8x64xf32> to vector<8x32xf32>
    %40 = vector.extract_strided_slice %22 {offsets = [0, 64], sizes = [8, 32], strides = [1, 1]} : vector<8x96xf32> to vector<8x32xf32>
    %41 = vector.extract_strided_slice %38 {offsets = [0, 0], sizes = [8, 8], strides = [1, 1]} : vector<8x32xf32> to vector<8x8xf32>
    %42 = arith.truncf %41 : vector<8x8xf32> to vector<8x8xbf16>
    %43 = vector.extract_strided_slice %39 {offsets = [0, 0], sizes = [8, 8], strides = [1, 1]} : vector<8x32xf32> to vector<8x8xf32>
    %44 = arith.truncf %43 : vector<8x8xf32> to vector<8x8xbf16>
    %45 = vector.extract_strided_slice %40 {offsets = [0, 0], sizes = [8, 8], strides = [1, 1]} : vector<8x32xf32> to vector<8x8xf32>
    %46 = arith.truncf %45 : vector<8x8xf32> to vector<8x8xbf16>
    %cst_20 = arith.constant dense<0.000000e+00> : vector<8x8xf32>
    %47 = tpu.matmul %42, %44, %cst_20 {dimension_numbers = #tpu.dot_dimension_numbers<[1], [1], [0], [0], [0, 0, 1, 0], [], []>} : vector<8x8xbf16>, vector<8x8xbf16>, vector<8x8xf32> -> vector<8x8xf32>
    %cst_21 = arith.constant 0.353553385 : f32
    %48 = vector.broadcast %cst_21 : f32 to vector<8x8xf32>
    %49 = arith.mulf %47, %48 : vector<8x8xf32>
    %cst_22 = arith.constant dense<0xFF800000> : vector<8xf32>
    %50 = vector.multi_reduction <maximumf>, %49, %cst_22 [1] : vector<8x8xf32> to vector<8xf32>
    %51 = vector.shape_cast %50 : vector<8xf32> to vector<8x1xf32>
    %52 = vector.broadcast %51 : vector<8x1xf32> to vector<8x8xf32>
    %53 = arith.subf %49, %52 : vector<8x8xf32>
    %54 = math.exp %53 : vector<8x8xf32>
    %cst_23 = arith.constant dense<0.000000e+00> : vector<8xf32>
    %55 = vector.multi_reduction <add>, %54, %cst_23 [1] : vector<8x8xf32> to vector<8xf32>
    %56 = vector.shape_cast %55 : vector<8xf32> to vector<8x1xf32>
    %57 = tpu.reciprocal %56 {approx = true} : vector<8x1xf32> -> vector<8x1xf32>
    %58 = vector.broadcast %57 : vector<8x1xf32> to vector<8x8xf32>
    %59 = arith.mulf %54, %58 : vector<8x8xf32>
    %60 = arith.truncf %59 : vector<8x8xf32> to vector<8x8xbf16>
    %cst_24 = arith.constant dense<0.000000e+00> : vector<8x8xf32>
    %61 = tpu.matmul %60, %46, %cst_24 {dimension_numbers = #tpu.dot_dimension_numbers<[1], [0], [0], [1], [0, 0, 1, 1], [], []>} : vector<8x8xbf16>, vector<8x8xbf16>, vector<8x8xf32> -> vector<8x8xf32>
    %c0_25 = arith.constant 0 : index
    %c0_26 = arith.constant 0 : index
    %62 = vector.load %arg13[%c0_25, %c0_26] : memref<8x32xf32, #tpu.memory_space<vmem>>, vector<8x8xf32>
    tpu.vector_store %arg13[%c0_25, %c0_26], %61 {strides = array<i32>} : memref<8x32xf32, #tpu.memory_space<vmem>>, vector<8x8xf32>,
    %63 = vector.extract_strided_slice %38 {offsets = [0, 8], sizes = [8, 8], strides = [1, 1]} : vector<8x32xf32> to vector<8x8xf32>
    %64 = arith.truncf %63 : vector<8x8xf32> to vector<8x8xbf16>
    %65 = vector.extract_strided_slice %39 {offsets = [0, 8], sizes = [8, 8], strides = [1, 1]} : vector<8x32xf32> to vector<8x8xf32>
    %66 = arith.truncf %65 : vector<8x8xf32> to vector<8x8xbf16>
    %67 = vector.extract_strided_slice %40 {offsets = [0, 8], sizes = [8, 8], strides = [1, 1]} : vector<8x32xf32> to vector<8x8xf32>
    %68 = arith.truncf %67 : vector<8x8xf32> to vector<8x8xbf16>
    %cst_27 = arith.constant dense<0.000000e+00> : vector<8x8xf32>
    %69 = tpu.matmul %64, %66, %cst_27 {dimension_numbers = #tpu.dot_dimension_numbers<[1], [1], [0], [0], [0, 0, 1, 0], [], []>} : vector<8x8xbf16>, vector<8x8xbf16>, vector<8x8xf32> -> vector<8x8xf32>
    %cst_28 = arith.constant 0.353553385 : f32
    %70 = vector.broadcast %cst_28 : f32 to vector<8x8xf32>
    %71 = arith.mulf %69, %70 : vector<8x8xf32>
    %cst_29 = arith.constant dense<0xFF800000> : vector<8xf32>
    %72 = vector.multi_reduction <maximumf>, %71, %cst_29 [1] : vector<8x8xf32> to vector<8xf32>
    %73 = vector.shape_cast %72 : vector<8xf32> to vector<8x1xf32>
    %74 = vector.broadcast %73 : vector<8x1xf32> to vector<8x8xf32>
    %75 = arith.subf %71, %74 : vector<8x8xf32>
    %76 = math.exp %75 : vector<8x8xf32>
    %cst_30 = arith.constant dense<0.000000e+00> : vector<8xf32>
    %77 = vector.multi_reduction <add>, %76, %cst_30 [1] : vector<8x8xf32> to vector<8xf32>
    %78 = vector.shape_cast %77 : vector<8xf32> to vector<8x1xf32>
    %79 = tpu.reciprocal %78 {approx = true} : vector<8x1xf32> -> vector<8x1xf32>
    %80 = vector.broadcast %79 : vector<8x1xf32> to vector<8x8xf32>
    %81 = arith.mulf %76, %80 : vector<8x8xf32>
    %82 = arith.truncf %81 : vector<8x8xf32> to vector<8x8xbf16>
    %cst_31 = arith.constant dense<0.000000e+00> : vector<8x8xf32>
    %83 = tpu.matmul %82, %68, %cst_31 {dimension_numbers = #tpu.dot_dimension_numbers<[1], [0], [0], [1], [0, 0, 1, 1], [], []>} : vector<8x8xbf16>, vector<8x8xbf16>, vector<8x8xf32> -> vector<8x8xf32>
    %c0_32 = arith.constant 0 : index
    %c8 = arith.constant 8 : index
    %84 = vector.load %arg13[%c0_32, %c8] : memref<8x32xf32, #tpu.memory_space<vmem>>, vector<8x8xf32>
    tpu.vector_store %arg13[%c0_32, %c8], %83 {strides = array<i32>} : memref<8x32xf32, #tpu.memory_space<vmem>>, vector<8x8xf32>,
    %85 = vector.extract_strided_slice %38 {offsets = [0, 16], sizes = [8, 8], strides = [1, 1]} : vector<8x32xf32> to vector<8x8xf32>
    %86 = arith.truncf %85 : vector<8x8xf32> to vector<8x8xbf16>
    %87 = vector.extract_strided_slice %39 {offsets = [0, 16], sizes = [8, 8], strides = [1, 1]} : vector<8x32xf32> to vector<8x8xf32>
    %88 = arith.truncf %87 : vector<8x8xf32> to vector<8x8xbf16>
    %89 = vector.extract_strided_slice %40 {offsets = [0, 16], sizes = [8, 8], strides = [1, 1]} : vector<8x32xf32> to vector<8x8xf32>
    %90 = arith.truncf %89 : vector<8x8xf32> to vector<8x8xbf16>
    %cst_33 = arith.constant dense<0.000000e+00> : vector<8x8xf32>
    %91 = tpu.matmul %86, %88, %cst_33 {dimension_numbers = #tpu.dot_dimension_numbers<[1], [1], [0], [0], [0, 0, 1, 0], [], []>} : vector<8x8xbf16>, vector<8x8xbf16>, vector<8x8xf32> -> vector<8x8xf32>
    %cst_34 = arith.constant 0.353553385 : f32
    %92 = vector.broadcast %cst_34 : f32 to vector<8x8xf32>
    %93 = arith.mulf %91, %92 : vector<8x8xf32>
    %cst_35 = arith.constant dense<0xFF800000> : vector<8xf32>
    %94 = vector.multi_reduction <maximumf>, %93, %cst_35 [1] : vector<8x8xf32> to vector<8xf32>
    %95 = vector.shape_cast %94 : vector<8xf32> to vector<8x1xf32>
    %96 = vector.broadcast %95 : vector<8x1xf32> to vector<8x8xf32>
    %97 = arith.subf %93, %96 : vector<8x8xf32>
    %98 = math.exp %97 : vector<8x8xf32>
    %cst_36 = arith.constant dense<0.000000e+00> : vector<8xf32>
    %99 = vector.multi_reduction <add>, %98, %cst_36 [1] : vector<8x8xf32> to vector<8xf32>
    %100 = vector.shape_cast %99 : vector<8xf32> to vector<8x1xf32>
    %101 = tpu.reciprocal %100 {approx = true} : vector<8x1xf32> -> vector<8x1xf32>
    %102 = vector.broadcast %101 : vector<8x1xf32> to vector<8x8xf32>
    %103 = arith.mulf %98, %102 : vector<8x8xf32>
    %104 = arith.truncf %103 : vector<8x8xf32> to vector<8x8xbf16>
    %cst_37 = arith.constant dense<0.000000e+00> : vector<8x8xf32>
    %105 = tpu.matmul %104, %90, %cst_37 {dimension_numbers = #tpu.dot_dimension_numbers<[1], [0], [0], [1], [0, 0, 1, 1], [], []>} : vector<8x8xbf16>, vector<8x8xbf16>, vector<8x8xf32> -> vector<8x8xf32>
    %c0_38 = arith.constant 0 : index
    %c16 = arith.constant 16 : index
    %106 = vector.load %arg13[%c0_38, %c16] : memref<8x32xf32, #tpu.memory_space<vmem>>, vector<8x8xf32>
    tpu.vector_store %arg13[%c0_38, %c16], %105 {strides = array<i32>} : memref<8x32xf32, #tpu.memory_space<vmem>>, vector<8x8xf32>,
    %107 = vector.extract_strided_slice %38 {offsets = [0, 24], sizes = [8, 8], strides = [1, 1]} : vector<8x32xf32> to vector<8x8xf32>
    %108 = arith.truncf %107 : vector<8x8xf32> to vector<8x8xbf16>
    %109 = vector.extract_strided_slice %39 {offsets = [0, 24], sizes = [8, 8], strides = [1, 1]} : vector<8x32xf32> to vector<8x8xf32>
    %110 = arith.truncf %109 : vector<8x8xf32> to vector<8x8xbf16>
    %111 = vector.extract_strided_slice %40 {offsets = [0, 24], sizes = [8, 8], strides = [1, 1]} : vector<8x32xf32> to vector<8x8xf32>
    %112 = arith.truncf %111 : vector<8x8xf32> to vector<8x8xbf16>
    %cst_39 = arith.constant dense<0.000000e+00> : vector<8x8xf32>
    %113 = tpu.matmul %108, %110, %cst_39 {dimension_numbers = #tpu.dot_dimension_numbers<[1], [1], [0], [0], [0, 0, 1, 0], [], []>} : vector<8x8xbf16>, vector<8x8xbf16>, vector<8x8xf32> -> vector<8x8xf32>
    %cst_40 = arith.constant 0.353553385 : f32
    %114 = vector.broadcast %cst_40 : f32 to vector<8x8xf32>
    %115 = arith.mulf %113, %114 : vector<8x8xf32>
    %cst_41 = arith.constant dense<0xFF800000> : vector<8xf32>
    %116 = vector.multi_reduction <maximumf>, %115, %cst_41 [1] : vector<8x8xf32> to vector<8xf32>
    %117 = vector.shape_cast %116 : vector<8xf32> to vector<8x1xf32>
    %118 = vector.broadcast %117 : vector<8x1xf32> to vector<8x8xf32>
    %119 = arith.subf %115, %118 : vector<8x8xf32>
    %120 = math.exp %119 : vector<8x8xf32>
    %cst_42 = arith.constant dense<0.000000e+00> : vector<8xf32>
    %121 = vector.multi_reduction <add>, %120, %cst_42 [1] : vector<8x8xf32> to vector<8xf32>
    %122 = vector.shape_cast %121 : vector<8xf32> to vector<8x1xf32>
    %123 = tpu.reciprocal %122 {approx = true} : vector<8x1xf32> -> vector<8x1xf32>
    %124 = vector.broadcast %123 : vector<8x1xf32> to vector<8x8xf32>
    %125 = arith.mulf %120, %124 : vector<8x8xf32>
    %126 = arith.truncf %125 : vector<8x8xf32> to vector<8x8xbf16>
    %cst_43 = arith.constant dense<0.000000e+00> : vector<8x8xf32>
    %127 = tpu.matmul %126, %112, %cst_43 {dimension_numbers = #tpu.dot_dimension_numbers<[1], [0], [0], [1], [0, 0, 1, 1], [], []>} : vector<8x8xbf16>, vector<8x8xbf16>, vector<8x8xf32> -> vector<8x8xf32>
    %c0_44 = arith.constant 0 : index
    %c24 = arith.constant 24 : index
    %128 = vector.load %arg13[%c0_44, %c24] : memref<8x32xf32, #tpu.memory_space<vmem>>, vector<8x8xf32>
    tpu.vector_store %arg13[%c0_44, %c24], %127 {strides = array<i32>} : memref<8x32xf32, #tpu.memory_space<vmem>>, vector<8x8xf32>,
    %c0_45 = arith.constant 0 : index
    %c0_46 = arith.constant 0 : index
    %129 = vector.load %arg13[%c0_45, %c0_46] : memref<8x32xf32, #tpu.memory_space<vmem>>, vector<8x32xf32>
    %c0_47 = arith.constant 0 : index
    %c0_48 = arith.constant 0 : index
    %c0_49 = arith.constant 0 : index
    %130 = vector.load %arg9[%c0_47, %c0_48, %c0_49] : memref<1x32x32xbf16, #tpu.memory_space<vmem>>, vector<1x32x32xbf16>
    %131 = vector.shape_cast %130 : vector<1x32x32xbf16> to vector<32x32xbf16>
    %132 = arith.truncf %129 : vector<8x32xf32> to vector<8x32xbf16>
    %cst_50 = arith.constant dense<0.000000e+00> : vector<8x32xf32>
    %133 = tpu.matmul %132, %131, %cst_50 {dimension_numbers = #tpu.dot_dimension_numbers<[1], [0], [0], [1], [0, 0, 1, 1], [], []>} : vector<8x32xbf16>, vector<32x32xbf16>, vector<8x32xf32> -> vector<8x32xf32>
    %134 = arith.addf %4, %133 : vector<8x32xf32>
    %c0_51 = arith.constant 0 : index
    %c0_52 = arith.constant 0 : index
    %c0_53 = arith.constant 0 : index
    %135 = vector.load %arg7[%c0_51, %c0_52, %c0_53] : memref<1x1x32xf32, #tpu.memory_space<vmem>>, vector<1x1x32xf32>
    %136 = vector.shape_cast %135 : vector<1x1x32xf32> to vector<1x32xf32>
    %137 = arith.mulf %134, %134 : vector<8x32xf32>
    %cst_54 = arith.constant dense<0.000000e+00> : vector<8xf32>
    %138 = vector.multi_reduction <add>, %137, %cst_54 [1] : vector<8x32xf32> to vector<8xf32>
    %139 = vector.shape_cast %138 : vector<8xf32> to vector<8x1xf32>
    %cst_55 = arith.constant 3.200000e+01 : f32
    %140 = vector.broadcast %cst_55 : f32 to vector<8x1xf32>
    %141 = arith.divf %139, %140 : vector<8x1xf32>
    %cst_56 = arith.constant 9.99999997E-7 : f32
    %142 = vector.broadcast %cst_56 : f32 to vector<8x1xf32>
    %143 = arith.addf %141, %142 : vector<8x1xf32>
    %144 = math.rsqrt %143 : vector<8x1xf32>
    %145 = vector.broadcast %144 : vector<8x1xf32> to vector<8x32xf32>
    %146 = arith.mulf %134, %145 : vector<8x32xf32>
    %147 = vector.broadcast %136 : vector<1x32xf32> to vector<8x32xf32>
    %148 = arith.mulf %146, %147 : vector<8x32xf32>
    %c0_57 = arith.constant 0 : index
    %c0_58 = arith.constant 0 : index
    %c0_59 = arith.constant 0 : index
    %149 = vector.load %arg10[%c0_57, %c0_58, %c0_59] : memref<1x32x128xbf16, #tpu.memory_space<vmem>>, vector<1x32x128xbf16>
    %150 = vector.shape_cast %149 : vector<1x32x128xbf16> to vector<32x128xbf16>
    %151 = arith.truncf %148 : vector<8x32xf32> to vector<8x32xbf16>
    %cst_60 = arith.constant dense<0.000000e+00> : vector<8x128xf32>
    %152 = tpu.matmul %151, %150, %cst_60 {dimension_numbers = #tpu.dot_dimension_numbers<[1], [0], [0], [1], [0, 0, 1, 1], [], []>} : vector<8x32xbf16>, vector<32x128xbf16>, vector<8x128xf32> -> vector<8x128xf32>
    %153 = arith.negf %152 : vector<8x128xf32>
    %154 = math.exp %153 : vector<8x128xf32>
    %cst_61 = arith.constant 1.000000e+00 : f32
    %155 = vector.broadcast %cst_61 : f32 to vector<8x128xf32>
    %156 = arith.addf %155, %154 : vector<8x128xf32>
    %157 = arith.divf %155, %156 : vector<8x128xf32>
    %158 = arith.mulf %152, %157 : vector<8x128xf32>
    %c0_62 = arith.constant 0 : index
    %c0_63 = arith.constant 0 : index
    %c0_64 = arith.constant 0 : index
    %159 = vector.load %arg11[%c0_62, %c0_63, %c0_64] : memref<1x128x32xbf16, #tpu.memory_space<vmem>>, vector<1x128x32xbf16>
    %160 = vector.shape_cast %159 : vector<1x128x32xbf16> to vector<128x32xbf16>
    %161 = arith.truncf %158 : vector<8x128xf32> to vector<8x128xbf16>
    %cst_65 = arith.constant dense<0.000000e+00> : vector<8x32xf32>
    %162 = tpu.matmul %161, %160, %cst_65 {dimension_numbers = #tpu.dot_dimension_numbers<[1], [0], [0], [1], [0, 0, 1, 1], [], []>} : vector<8x128xbf16>, vector<128x32xbf16>, vector<8x32xf32> -> vector<8x32xf32>
    %163 = arith.addf %134, %162 : vector<8x32xf32>
    %c0_66 = arith.constant 0 : index
    %c0_67 = arith.constant 0 : index
    %c0_68 = arith.constant 0 : index
    %164 = vector.load %arg12[%c0_66, %c0_67, %c0_68] : memref<1x8x32xf32, #tpu.memory_space<vmem>>, vector<1x8x32xf32>
    %165 = vector.shape_cast %164 : vector<1x8x32xf32> to vector<8x32xf32>
    %166 = vector.shape_cast %163 : vector<8x32xf32> to vector<1x8x32xf32>
    tpu.vector_store %arg12[%c0_66, %c0_67, %c0_68], %166 {strides = array<i32>} : memref<1x8x32xf32, #tpu.memory_space<vmem>>, vector<1x8x32xf32>,
    return
  }
  func.func @transform_0(%arg0: i32, %arg1: i32) -> (i32, i32, i32) {
    %c0_i32 = arith.constant 0 : i32
    %c0_i32_0 = arith.constant 0 : i32
    %c0_i32_1 = arith.constant 0 : i32
    return %arg0, %c0_i32, %c0_i32_0 : i32, i32, i32
  }
  func.func @transform_1(%arg0: i32, %arg1: i32) -> (i32, i32) {
    %c0_i32 = arith.constant 0 : i32
    %c0_i32_0 = arith.constant 0 : i32
    %c0_i32_1 = arith.constant 0 : i32
    return %c0_i32, %c0_i32_0 : i32, i32
  }
  func.func @transform_2(%arg0: i32, %arg1: i32) -> (i32, i32) {
    %c0_i32 = arith.constant 0 : i32
    %c0_i32_0 = arith.constant 0 : i32
    %c0_i32_1 = arith.constant 0 : i32
    return %c0_i32, %c0_i32_0 : i32, i32
  }
  func.func @transform_3(%arg0: i32, %arg1: i32) -> (i32, i32) {
    %c0_i32 = arith.constant 0 : i32
    %c0_i32_0 = arith.constant 0 : i32
    %c0_i32_1 = arith.constant 0 : i32
    return %c0_i32, %c0_i32_0 : i32, i32
  }
  func.func @transform_4(%arg0: i32, %arg1: i32) -> (i32, i32, i32) {
    %c0_i32 = arith.constant 0 : i32
    %c0_i32_0 = arith.constant 0 : i32
    %c0_i32_1 = arith.constant 0 : i32
    return %arg1, %c0_i32, %c0_i32_0 : i32, i32, i32
  }
  func.func @transform_5(%arg0: i32, %arg1: i32) -> (i32, i32, i32) {
    %c0_i32 = arith.constant 0 : i32
    %c0_i32_0 = arith.constant 0 : i32
    %c0_i32_1 = arith.constant 0 : i32
    return %arg1, %c0_i32, %c0_i32_0 : i32, i32, i32
  }
  func.func @transform_6(%arg0: i32, %arg1: i32) -> (i32, i32, i32) {
    %c0_i32 = arith.constant 0 : i32
    %c0_i32_0 = arith.constant 0 : i32
    %c0_i32_1 = arith.constant 0 : i32
    return %arg1, %c0_i32, %c0_i32_0 : i32, i32, i32
  }
  func.func @transform_7(%arg0: i32, %arg1: i32) -> (i32, i32, i32) {
    %c0_i32 = arith.constant 0 : i32
    %c0_i32_0 = arith.constant 0 : i32
    %c0_i32_1 = arith.constant 0 : i32
    return %arg1, %c0_i32, %c0_i32_0 : i32, i32, i32
  }
  func.func @transform_8(%arg0: i32, %arg1: i32) -> (i32, i32, i32) {
    %c0_i32 = arith.constant 0 : i32
    %c0_i32_0 = arith.constant 0 : i32
    %c0_i32_1 = arith.constant 0 : i32
    return %arg1, %c0_i32, %c0_i32_0 : i32, i32, i32
  }
  func.func @transform_9(%arg0: i32, %arg1: i32) -> (i32, i32, i32) {
    %c0_i32 = arith.constant 0 : i32
    %c0_i32_0 = arith.constant 0 : i32
    %c0_i32_1 = arith.constant 0 : i32
    return %arg1, %c0_i32, %c0_i32_0 : i32, i32, i32
  }
  func.func @transform_10(%arg0: i32, %arg1: i32) -> (i32, i32, i32) {
    %c0_i32 = arith.constant 0 : i32
    %c0_i32_0 = arith.constant 0 : i32
    %c0_i32_1 = arith.constant 0 : i32
    return %arg0, %c0_i32, %c0_i32_0 : i32, i32, i32
  }
}

</mosaic_0001>

<llo_original>
// kernel: base_transformer_forward.1
$region0: #{base_transformer_forward.1}
  #allocation0 [shape = 'u32[]', space=smem, size = 0x4, offset = 0x4, fixed_abs, tag = 'smem constant byte address 0x4 - core index']
  #allocation1 [shape = 'u32[144,128]{1,0:T(1,128)}', space=vmem, size = 0x12000, scoped, tag = 'internal scratch']
  #allocation2 [shape = 'f32[8,32]{1,0:T(8,128)}', space=vmem, size = 0x1000, scoped, tag = 'scratch operand']
  %s0 = inlined_call_operand.hbm [shape: f32[2,8,32], index: 0, kind: input, shape index: {}]
  %s1 = inlined_call_operand.hbm [shape: f32[8,64], index: 1, kind: input, shape index: {}]
  %s2 = inlined_call_operand.hbm [shape: f32[8,64], index: 2, kind: input, shape index: {}]
  %s3 = inlined_call_operand.hbm [shape: f32[8,64], index: 3, kind: input, shape index: {}]
  %s4 = inlined_call_operand.hbm [shape: f32[2,1,32], index: 4, kind: input, shape index: {}]
  %s5 = inlined_call_operand.hbm [shape: f32[2,1,32], index: 5, kind: input, shape index: {}]
  %s6 = inlined_call_operand.hbm [shape: bf16[2,32,96], index: 6, kind: input, shape index: {}]
  %s7 = inlined_call_operand.hbm [shape: bf16[2,32,32], index: 7, kind: input, shape index: {}]
  %s8 = inlined_call_operand.hbm [shape: bf16[2,32,128], index: 8, kind: input, shape index: {}]
  %s9 = inlined_call_operand.hbm [shape: bf16[2,128,32], index: 9, kind: input, shape index: {}]
  %s10 = inlined_call_operand.hbm [shape: f32[2,8,32], index: 10, kind: output, shape index: {}]
  %s11 = sld [smem:[#allocation0]]
  $region117: #{base_transformer_forward.1} parent=0
    _
  %s13 = ssub.s32 1, %s11
  %s14 = scalar_select 0, %s13, %s11
  $region1: #{base_transformer_forward.1} parent=0
    #allocation3 [shape = 'u8[8192]{0}', space=vmem, size = 0x2000, scoped, tag = 'input window, operand 0']
    #allocation4 [shape = 's32[2]{0}', space=sflag, size = 0x8, scoped, tag = 'scoped memory for base_transformer_forward.1']
    #allocation5 [shape = 's32[2]{0}', space=sflag, size = 0x8, scoped, tag = 'scoped memory for base_transformer_forward.1']
    #allocation6 [shape = 'u8[4096]{0}', space=vmem, size = 0x1000, scoped, tag = 'input window, operand 1, single buffered']
    #allocation7 [shape = 's32[1]{0}', space=sflag, size = 0x4, scoped, tag = 'scoped memory for base_transformer_forward.1']
    #allocation8 [shape = 'u8[4096]{0}', space=vmem, size = 0x1000, scoped, tag = 'input window, operand 2, single buffered']
    #allocation9 [shape = 'u8[4096]{0}', space=vmem, size = 0x1000, scoped, tag = 'input window, operand 3, single buffered']
    #allocation10 [shape = 's32[1]{0}', space=sflag, size = 0x4, scoped, tag = 'scoped memory for base_transformer_forward.1']
    #allocation11 [shape = 'u8[1024]{0}', space=vmem, size = 0x400, scoped, tag = 'input window, operand 4']
    #allocation12 [shape = 'u8[1024]{0}', space=vmem, size = 0x400, scoped, tag = 'input window, operand 5']
    #allocation13 [shape = 'u8[16384]{0}', space=vmem, size = 0x4000, scoped, tag = 'input window, operand 6']
    #allocation14 [shape = 'u8[16384]{0}', space=vmem, size = 0x4000, scoped, tag = 'input window, operand 7']
    #allocation15 [shape = 'u8[16384]{0}', space=vmem, size = 0x4000, scoped, tag = 'input window, operand 8']
    #allocation16 [shape = 'u8[65536]{0}', space=vmem, size = 0x10000, scoped, tag = 'input window, operand 9']
    #allocation17 [shape = 'u8[8192]{0}', space=vmem, size = 0x2000, scoped, tag = 'output window, operand 0']
    %15 = vsyncpa [#allocation4], 0
    %s16 = scalar_lea.sflag [#allocation4], 1
    %17 = vsyncpa %s16, 0
    %18 = vsyncpa [#allocation7], 0
    %19 = vsyncpa [#allocation10], 0
    %20 = vsyncpa [#allocation5], 0
    %s21 = scalar_lea.sflag [#allocation5], 1
    %22 = vsyncpa %s21, 0
    loop: start=0, step=1, limit=6
    $region2: #{base_transformer_forward.1} parent=1 // loop_pre_header
      _
    $region3: #{base_transformer_forward.1} parent=1 // loop_header
      %s24 = sphi 0, %s28
      %p25 = scmp.ge.s32.totalorder %s24, 6
      %s31 = sphi 0, %s43
      %s32 = sphi 0, %s39
      %s33 = sphi 0, %s31
      %s34 = sphi 0, %s32
      %s35 = sphi 0, %s33
      %s36 = sphi 0, %s34
      %s46 = sphi 0, %s48
      %s49 = sphi 0, %s46
      %s50 = sphi 0, %s49
      %s66 = sphi 0, %s50
      %s70 = sphi 0, %s70
      %s72 = sphi 0, %s70
      %s73 = sphi 0, %s72
      %s87 = sphi 0, %s73
      %s91 = sphi 0, %s91
      %s93 = sphi 0, %s91
      %s94 = sphi 0, %s93
      %s108 = sphi 0, %s94
      %s112 = sphi 0, %s112
      %s114 = sphi 0, %s112
      %s115 = sphi 0, %s114
      %s129 = sphi 0, %s115
      %s135 = sphi 0, %s137
      %s138 = sphi 0, %s135
      %s139 = sphi 0, %s138
      %s155 = sphi 0, %s139
      %s161 = sphi 0, %s163
      %s164 = sphi 0, %s161
      %s165 = sphi 0, %s164
      %s181 = sphi 0, %s165
      %s187 = sphi 0, %s189
      %s190 = sphi 0, %s187
      %s191 = sphi 0, %s190
      %s207 = sphi 0, %s191
      %s213 = sphi 0, %s215
      %s216 = sphi 0, %s213
      %s217 = sphi 0, %s216
      %s233 = sphi 0, %s217
      %s239 = sphi 0, %s241
      %s242 = sphi 0, %s239
      %s243 = sphi 0, %s242
      %s259 = sphi 0, %s243
      %s265 = sphi 0, %s267
      %s268 = sphi 0, %s265
      %s269 = sphi 0, %s268
      %s285 = sphi 0, %s269
      %s291 = sphi 0, %s293
      %s294 = sphi 0, %s291
      %s295 = sphi 0, %s294
      %s311 = sphi 0, %s295
    $region4: #{base_transformer_forward.1} parent=1 // loop_header_branch
      %27 = sbr.rel (%p25) target = $region8
    $region5: #{base_transformer_forward.1} parent=1 // loop_body
      %s29 = ssub.s32 %s24, 1
      %s30 = ssub.s32 %s24, 2
      %s37 = sadd.s32 1, %s32
      %p38 = scmp.ge.s32.totalorder %s37, 2
      %s39 = scalar_select %p38, 0, %s37
      %s40 = sadd.s32 1, %s31
      %s41 = scalar_select %p38, %s40, %s31
      %p42 = scmp.ge.s32.totalorder %s41, 2
      %s43 = scalar_select %p42, 0, %s41
      %s44 = ssub.s32 %s31, %s43
      %p45 = scmp.eq.s32.totalorder %s44, 0
      %s47 = sadd.s32 %s46, 1
      %s48 = scalar_select %p45, %s46, %s47
      %p51 = pneg %p45
      %p52 = scmp.eq.s32.totalorder %s24, 3
      %p53 = por %p51, %p52
      %p54 = scmp.ne.s32.totalorder %s46, %s49
      %p55 = scmp.eq.s32.totalorder %s24, 0
      %p56 = por %p54, %p55
      %p57 = scmp.ne.s32.totalorder %s46, %s49
      %p58 = scmp.eq.s32.totalorder %s29, 3
      %p59 = por %p57, %p58
      %p60 = scmp.ne.s32.totalorder %s49, %s50
      %p61 = scmp.eq.s32.totalorder %s29, 0
      %p62 = por %p60, %p61
      %p63 = scmp.ne.s32.totalorder %s49, %s50
      %p64 = scmp.eq.s32.totalorder %s30, 3
      %p65 = por %p63, %p64
      %p67 = scmp.ne.s32.totalorder %s50, %s66
      %p68 = scmp.eq.s32.totalorder %s30, 0
      %p69 = por %p67, %p68
      %s71 = sadd.s32 %s70, 1
      %p74 = scmp.eq.s32.totalorder %s24, 3
      %p75 = scmp.ne.s32.totalorder %s70, %s72
      %p76 = scmp.eq.s32.totalorder %s24, 0
      %p77 = por %p75, %p76
      %p78 = scmp.ne.s32.totalorder %s70, %s72
      %p79 = scmp.eq.s32.totalorder %s29, 3
      %p80 = por %p78, %p79
      %p81 = scmp.ne.s32.totalorder %s72, %s73
      %p82 = scmp.eq.s32.totalorder %s29, 0
      %p83 = por %p81, %p82
      %p84 = scmp.ne.s32.totalorder %s72, %s73
      %p85 = scmp.eq.s32.totalorder %s30, 3
      %p86 = por %p84, %p85
      %p88 = scmp.ne.s32.totalorder %s73, %s87
      %p89 = scmp.eq.s32.totalorder %s30, 0
      %p90 = por %p88, %p89
      %s92 = sadd.s32 %s91, 1
      %p95 = scmp.eq.s32.totalorder %s24, 3
      %p96 = scmp.ne.s32.totalorder %s91, %s93
      %p97 = scmp.eq.s32.totalorder %s24, 0
      %p98 = por %p96, %p97
      %p99 = scmp.ne.s32.totalorder %s91, %s93
      %p100 = scmp.eq.s32.totalorder %s29, 3
      %p101 = por %p99, %p100
      %p102 = scmp.ne.s32.totalorder %s93, %s94
      %p103 = scmp.eq.s32.totalorder %s29, 0
      %p104 = por %p102, %p103
      %p105 = scmp.ne.s32.totalorder %s93, %s94
      %p106 = scmp.eq.s32.totalorder %s30, 3
      %p107 = por %p105, %p106
      %p109 = scmp.ne.s32.totalorder %s94, %s108
      %p110 = scmp.eq.s32.totalorder %s30, 0
      %p111 = por %p109, %p110
      %s113 = sadd.s32 %s112, 1
      %p116 = scmp.eq.s32.totalorder %s24, 3
      %p117 = scmp.ne.s32.totalorder %s112, %s114
      %p118 = scmp.eq.s32.totalorder %s24, 0
      %p119 = por %p117, %p118
      %p120 = scmp.ne.s32.totalorder %s112, %s114
      %p121 = scmp.eq.s32.totalorder %s29, 3
      %p122 = por %p120, %p121
      %p123 = scmp.ne.s32.totalorder %s114, %s115
      %p124 = scmp.eq.s32.totalorder %s29, 0
      %p125 = por %p123, %p124
      %p126 = scmp.ne.s32.totalorder %s114, %s115
      %p127 = scmp.eq.s32.totalorder %s30, 3
      %p128 = por %p126, %p127
      %p130 = scmp.ne.s32.totalorder %s115, %s129
      %p131 = scmp.eq.s32.totalorder %s30, 0
      %p132 = por %p130, %p131
      %s133 = ssub.s32 %s32, %s39
      %p134 = scmp.eq.s32.totalorder %s133, 0
      %s136 = sadd.s32 %s135, 1
      %s137 = scalar_select %p134, %s135, %s136
      %p140 = pneg %p134
      %p141 = scmp.eq.s32.totalorder %s24, 3
      %p142 = por %p140, %p141
      %p143 = scmp.ne.s32.totalorder %s135, %s138
      %p144 = scmp.eq.s32.totalorder %s24, 0
      %p145 = por %p143, %p144
      %p146 = scmp.ne.s32.totalorder %s135, %s138
      %p147 = scmp.eq.s32.totalorder %s29, 3
      %p148 = por %p146, %p147
      %p149 = scmp.ne.s32.totalorder %s138, %s139
      %p150 = scmp.eq.s32.totalorder %s29, 0
      %p151 = por %p149, %p150
      %p152 = scmp.ne.s32.totalorder %s138, %s139
      %p153 = scmp.eq.s32.totalorder %s30, 3
      %p154 = por %p152, %p153
      %p156 = scmp.ne.s32.totalorder %s139, %s155
      %p157 = scmp.eq.s32.totalorder %s30, 0
      %p158 = por %p156, %p157
      %s159 = ssub.s32 %s32, %s39
      %p160 = scmp.eq.s32.totalorder %s159, 0
      %s162 = sadd.s32 %s161, 1
      %s163 = scalar_select %p160, %s161, %s162
      %p166 = pneg %p160
      %p167 = scmp.eq.s32.totalorder %s24, 3
      %p168 = por %p166, %p167
      %p169 = scmp.ne.s32.totalorder %s161, %s164
      %p170 = scmp.eq.s32.totalorder %s24, 0
      %p171 = por %p169, %p170
      %p172 = scmp.ne.s32.totalorder %s161, %s164
      %p173 = scmp.eq.s32.totalorder %s29, 3
      %p174 = por %p172, %p173
      %p175 = scmp.ne.s32.totalorder %s164, %s165
      %p176 = scmp.eq.s32.totalorder %s29, 0
      %p177 = por %p175, %p176
      %p178 = scmp.ne.s32.totalorder %s164, %s165
      %p179 = scmp.eq.s32.totalorder %s30, 3
      %p180 = por %p178, %p179
      %p182 = scmp.ne.s32.totalorder %s165, %s181
      %p183 = scmp.eq.s32.totalorder %s30, 0
      %p184 = por %p182, %p183
      %s185 = ssub.s32 %s32, %s39
      %p186 = scmp.eq.s32.totalorder %s185, 0
      %s188 = sadd.s32 %s187, 1
      %s189 = scalar_select %p186, %s187, %s188
      %p192 = pneg %p186
      %p193 = scmp.eq.s32.totalorder %s24, 3
      %p194 = por %p192, %p193
      %p195 = scmp.ne.s32.totalorder %s187, %s190
      %p196 = scmp.eq.s32.totalorder %s24, 0
      %p197 = por %p195, %p196
      %p198 = scmp.ne.s32.totalorder %s187, %s190
      %p199 = scmp.eq.s32.totalorder %s29, 3
      %p200 = por %p198, %p199
      %p201 = scmp.ne.s32.totalorder %s190, %s191
      %p202 = scmp.eq.s32.totalorder %s29, 0
      %p203 = por %p201, %p202
      %p204 = scmp.ne.s32.totalorder %s190, %s191
      %p205 = scmp.eq.s32.totalorder %s30, 3
      %p206 = por %p204, %p205
      %p208 = scmp.ne.s32.totalorder %s191, %s207
      %p209 = scmp.eq.s32.totalorder %s30, 0
      %p210 = por %p208, %p209
      %s211 = ssub.s32 %s32, %s39
      %p212 = scmp.eq.s32.totalorder %s211, 0
      %s214 = sadd.s32 %s213, 1
      %s215 = scalar_select %p212, %s213, %s214
      %p218 = pneg %p212
      %p219 = scmp.eq.s32.totalorder %s24, 3
      %p220 = por %p218, %p219
      %p221 = scmp.ne.s32.totalorder %s213, %s216
      %p222 = scmp.eq.s32.totalorder %s24, 0
      %p223 = por %p221, %p222
      %p224 = scmp.ne.s32.totalorder %s213, %s216
      %p225 = scmp.eq.s32.totalorder %s29, 3
      %p226 = por %p224, %p225
      %p227 = scmp.ne.s32.totalorder %s216, %s217
      %p228 = scmp.eq.s32.totalorder %s29, 0
      %p229 = por %p227, %p228
      %p230 = scmp.ne.s32.totalorder %s216, %s217
      %p231 = scmp.eq.s32.totalorder %s30, 3
      %p232 = por %p230, %p231
      %p234 = scmp.ne.s32.totalorder %s217, %s233
      %p235 = scmp.eq.s32.totalorder %s30, 0
      %p236 = por %p234, %p235
      %s237 = ssub.s32 %s32, %s39
      %p238 = scmp.eq.s32.totalorder %s237, 0
      %s240 = sadd.s32 %s239, 1
      %s241 = scalar_select %p238, %s239, %s240
      %p244 = pneg %p238
      %p245 = scmp.eq.s32.totalorder %s24, 3
      %p246 = por %p244, %p245
      %p247 = scmp.ne.s32.totalorder %s239, %s242
      %p248 = scmp.eq.s32.totalorder %s24, 0
      %p249 = por %p247, %p248
      %p250 = scmp.ne.s32.totalorder %s239, %s242
      %p251 = scmp.eq.s32.totalorder %s29, 3
      %p252 = por %p250, %p251
      %p253 = scmp.ne.s32.totalorder %s242, %s243
      %p254 = scmp.eq.s32.totalorder %s29, 0
      %p255 = por %p253, %p254
      %p256 = scmp.ne.s32.totalorder %s242, %s243
      %p257 = scmp.eq.s32.totalorder %s30, 3
      %p258 = por %p256, %p257
      %p260 = scmp.ne.s32.totalorder %s243, %s259
      %p261 = scmp.eq.s32.totalorder %s30, 0
      %p262 = por %p260, %p261
      %s263 = ssub.s32 %s32, %s39
      %p264 = scmp.eq.s32.totalorder %s263, 0
      %s266 = sadd.s32 %s265, 1
      %s267 = scalar_select %p264, %s265, %s266
      %p270 = pneg %p264
      %p271 = scmp.eq.s32.totalorder %s24, 3
      %p272 = por %p270, %p271
      %p273 = scmp.ne.s32.totalorder %s265, %s268
      %p274 = scmp.eq.s32.totalorder %s24, 0
      %p275 = por %p273, %p274
      %p276 = scmp.ne.s32.totalorder %s265, %s268
      %p277 = scmp.eq.s32.totalorder %s29, 3
      %p278 = por %p276, %p277
      %p279 = scmp.ne.s32.totalorder %s268, %s269
      %p280 = scmp.eq.s32.totalorder %s29, 0
      %p281 = por %p279, %p280
      %p282 = scmp.ne.s32.totalorder %s268, %s269
      %p283 = scmp.eq.s32.totalorder %s30, 3
      %p284 = por %p282, %p283
      %p286 = scmp.ne.s32.totalorder %s269, %s285
      %p287 = scmp.eq.s32.totalorder %s30, 0
      %p288 = por %p286, %p287
      %s289 = ssub.s32 %s31, %s43
      %p290 = scmp.eq.s32.totalorder %s289, 0
      %s292 = sadd.s32 %s291, 1
      %s293 = scalar_select %p290, %s291, %s292
      %p296 = pneg %p290
      %p297 = scmp.eq.s32.totalorder %s24, 3
      %p298 = por %p296, %p297
      %p299 = scmp.ne.s32.totalorder %s291, %s294
      %p300 = scmp.eq.s32.totalorder %s24, 0
      %p301 = por %p299, %p300
      %p302 = scmp.ne.s32.totalorder %s291, %s294
      %p303 = scmp.eq.s32.totalorder %s29, 3
      %p304 = por %p302, %p303
      %p305 = scmp.ne.s32.totalorder %s294, %s295
      %p306 = scmp.eq.s32.totalorder %s29, 0
      %p307 = por %p305, %p306
      %p308 = scmp.ne.s32.totalorder %s294, %s295
      %p309 = scmp.eq.s32.totalorder %s30, 3
      %p310 = por %p308, %p309
      %p312 = scmp.ne.s32.totalorder %s295, %s311
      %p313 = scmp.eq.s32.totalorder %s30, 0
      %p314 = por %p312, %p313
      %p315 = scmp.le.s32.totalorder 1, %s24
      %p316 = scmp.lt.s32.totalorder %s24, 5
      %p317 = pnand %p315, %p316
      %p318 = pneg %p317
      // Predicated region
      $region9: #{base_transformer_forward.1} parent=5 // pred_check
        _
      $region10: #{base_transformer_forward.1} parent=5 // pred_check_branch
        %320 = sbr.rel (%p317) target = $region12
      $region11: #{base_transformer_forward.1} parent=5 // pred_region
        %s321 = ssub.s32 %s24, 1
        // Predicated region
        $region13: #{base_transformer_forward.1} parent=11 // pred_check
          %p322 = pneg %p83
        $region14: #{base_transformer_forward.1} parent=11 // pred_check_branch
          %324 = sbr.rel (%p322) target = $region16
        $region15: #{base_transformer_forward.1} parent=11 // pred_region
          %s326 = ssub.s32 128, 128
          %327 = vsyncadd [#allocation7], %s326
          %s329 = sshll.u32 [#allocation6], 4
          %s330 = int_to_ptr.vmem [resolvable:$true] %s329
          %332 = dma.hbm_to_vmem [thread:$0]  %s1, 128, %s330, [#allocation7]
        $region16: #{base_transformer_forward.1} parent=11 // pred_fallthru
          _
        // Predicated region
        $region17: #{base_transformer_forward.1} parent=11 // pred_check
          %p333 = pneg %p104
        $region18: #{base_transformer_forward.1} parent=11 // pred_check_branch
          %335 = sbr.rel (%p333) target = $region20
        $region19: #{base_transformer_forward.1} parent=11 // pred_region
          %s337 = ssub.s32 128, 128
          %338 = vsyncadd [#allocation7], %s337
          %s340 = sshll.u32 [#allocation8], 4
          %s341 = int_to_ptr.vmem [resolvable:$true] %s340
          %343 = dma.hbm_to_vmem [thread:$0]  %s2, 128, %s341, [#allocation7]
        $region20: #{base_transformer_forward.1} parent=11 // pred_fallthru
          _
        // Predicated region
        $region21: #{base_transformer_forward.1} parent=11 // pred_check
          %p344 = pneg %p125
        $region22: #{base_transformer_forward.1} parent=11 // pred_check_branch
          %346 = sbr.rel (%p344) target = $region24
        $region23: #{base_transformer_forward.1} parent=11 // pred_region
          %s348 = ssub.s32 128, 128
          %349 = vsyncadd [#allocation10], %s348
          %s351 = sshll.u32 [#allocation9], 4
          %s352 = int_to_ptr.vmem [resolvable:$true] %s351
          %354 = dma.hbm_to_vmem [thread:$0]  %s3, 128, %s352, [#allocation10]
        $region24: #{base_transformer_forward.1} parent=11 // pred_fallthru
          _
      $region12: #{base_transformer_forward.1} parent=5 // pred_fallthru
        _
      %p355 = scmp.lt.s32.totalorder %s24, 4
      // Predicated region
      $region25: #{base_transformer_forward.1} parent=5 // pred_check
        %p356 = pneg %p355
      $region26: #{base_transformer_forward.1} parent=5 // pred_check_branch
        %358 = sbr.rel (%p356) target = $region28
      $region27: #{base_transformer_forward.1} parent=5 // pred_region
        // Predicated region
        $region29: #{base_transformer_forward.1} parent=27 // pred_check
          %p359 = pneg %p56
        $region30: #{base_transformer_forward.1} parent=27 // pred_check_branch
          %361 = sbr.rel (%p359) target = $region32
        $region31: #{base_transformer_forward.1} parent=27 // pred_region
          %s362 = sand.u32 %s24, 1
          %s363 = scalar_lea.sflag [#allocation4], %s362
          %s364 = sand.u32 %s46, 1
          %s365 = smul.addr %s364, 8
          %s366 = scalar_lea.vmem [#allocation3], %s365
          %s368 = ssub.s32 128, 128
          %369 = vsyncadd %s363, %s368
          %s370 = smul.addr %s31, 128
          %s371 = scalar_lea.hbm %s0, %s370
          %s373 = sshll.u32 %s366, 4
          %s374 = int_to_ptr.vmem [resolvable:$true] %s373
          %376 = dma.hbm_to_vmem [thread:$0]  %s371, 128, %s374, %s363
        $region32: #{base_transformer_forward.1} parent=27 // pred_fallthru
          _
        // Predicated region
        $region33: #{base_transformer_forward.1} parent=27 // pred_check
          %p377 = pneg %p145
        $region34: #{base_transformer_forward.1} parent=27 // pred_check_branch
          %379 = sbr.rel (%p377) target = $region36
        $region35: #{base_transformer_forward.1} parent=27 // pred_region
          %s380 = sand.u32 %s24, 1
          %s381 = scalar_lea.sflag [#allocation4], %s380
          %s382 = sand.u32 %s135, 1
          %s383 = scalar_lea.vmem [#allocation11], %s382
          %s385 = ssub.s32 16, 16
          %386 = vsyncadd %s381, %s385
          %s387 = smul.addr %s32, 16
          %s388 = scalar_lea.hbm %s4, %s387
          %s390 = sshll.u32 %s383, 4
          %s391 = int_to_ptr.vmem [resolvable:$true] %s390
          %393 = dma.hbm_to_vmem [thread:$0]  %s388, 16, %s391, %s381
        $region36: #{base_transformer_forward.1} parent=27 // pred_fallthru
          _
        // Predicated region
        $region37: #{base_transformer_forward.1} parent=27 // pred_check
          %p394 = pneg %p171
        $region38: #{base_transformer_forward.1} parent=27 // pred_check_branch
          %396 = sbr.rel (%p394) target = $region40
        $region39: #{base_transformer_forward.1} parent=27 // pred_region
          %s397 = sand.u32 %s24, 1
          %s398 = scalar_lea.sflag [#allocation4], %s397
          %s399 = sand.u32 %s161, 1
          %s400 = scalar_lea.vmem [#allocation12], %s399
          %s402 = ssub.s32 16, 16
          %403 = vsyncadd %s398, %s402
          %s404 = smul.addr %s32, 16
          %s405 = scalar_lea.hbm %s5, %s404
          %s407 = sshll.u32 %s400, 4
          %s408 = int_to_ptr.vmem [resolvable:$true] %s407
          %410 = dma.hbm_to_vmem [thread:$0]  %s405, 16, %s408, %s398
        $region40: #{base_transformer_forward.1} parent=27 // pred_fallthru
          _
        // Predicated region
        $region41: #{base_transformer_forward.1} parent=27 // pred_check
          %p411 = pneg %p197
        $region42: #{base_transformer_forward.1} parent=27 // pred_check_branch
          %413 = sbr.rel (%p411) target = $region44
        $region43: #{base_transformer_forward.1} parent=27 // pred_region
          %s414 = sand.u32 %s24, 1
          %s415 = scalar_lea.sflag [#allocation4], %s414
          %s416 = sand.u32 %s187, 1
          %s417 = smul.addr %s416, 16
          %s418 = scalar_lea.vmem [#allocation13], %s417
          %s420 = ssub.s32 256, 256
          %421 = vsyncadd %s415, %s420
          %s422 = smul.addr %s32, 4
          %s423 = smul.addr %s422, 64
          %s424 = scalar_lea.hbm %s6, %s423
          %s425 = sshll.u32 %s418, 4
          %s426 = int_to_ptr.vmem [resolvable:$true] %s425
          %431 = dma.hbm_to_vmem [thread:$0]  %s424, 256, %s426, %s415, 64, 64, 4
        $region44: #{base_transformer_forward.1} parent=27 // pred_fallthru
          _
        // Predicated region
        $region45: #{base_transformer_forward.1} parent=27 // pred_check
          %p432 = pneg %p223
        $region46: #{base_transformer_forward.1} parent=27 // pred_check_branch
          %434 = sbr.rel (%p432) target = $region48
        $region47: #{base_transformer_forward.1} parent=27 // pred_region
          %s435 = sand.u32 %s24, 1
          %s436 = scalar_lea.sflag [#allocation4], %s435
          %s437 = sand.u32 %s213, 1
          %s438 = smul.addr %s437, 16
          %s439 = scalar_lea.vmem [#allocation14], %s438
          %s441 = ssub.s32 256, 256
          %442 = vsyncadd %s436, %s441
          %s443 = smul.addr %s32, 4
          %s444 = smul.addr %s443, 64
          %s445 = scalar_lea.hbm %s7, %s444
          %s446 = sshll.u32 %s439, 4
          %s447 = int_to_ptr.vmem [resolvable:$true] %s446
          %452 = dma.hbm_to_vmem [thread:$0]  %s445, 256, %s447, %s436, 64, 64, 4
        $region48: #{base_transformer_forward.1} parent=27 // pred_fallthru
          _
        // Predicated region
        $region49: #{base_transformer_forward.1} parent=27 // pred_check
          %p453 = pneg %p249
        $region50: #{base_transformer_forward.1} parent=27 // pred_check_branch
          %455 = sbr.rel (%p453) target = $region52
        $region51: #{base_transformer_forward.1} parent=27 // pred_region
          %s456 = sand.u32 %s24, 1
          %s457 = scalar_lea.sflag [#allocation4], %s456
          %s458 = sand.u32 %s239, 1
          %s459 = smul.addr %s458, 16
          %s460 = scalar_lea.vmem [#allocation15], %s459
          %s462 = ssub.s32 256, 256
          %463 = vsyncadd %s457, %s462
          %s464 = smul.addr %s32, 4
          %s465 = smul.addr %s464, 64
          %s466 = scalar_lea.hbm %s8, %s465
          %s467 = sshll.u32 %s460, 4
          %s468 = int_to_ptr.vmem [resolvable:$true] %s467
          %473 = dma.hbm_to_vmem [thread:$0]  %s466, 256, %s468, %s457, 64, 64, 4
        $region52: #{base_transformer_forward.1} parent=27 // pred_fallthru
          _
        // Predicated region
        $region53: #{base_transformer_forward.1} parent=27 // pred_check
          %p474 = pneg %p275
        $region54: #{base_transformer_forward.1} parent=27 // pred_check_branch
          %476 = sbr.rel (%p474) target = $region56
        $region55: #{base_transformer_forward.1} parent=27 // pred_region
          %s477 = sand.u32 %s24, 1
          %s478 = scalar_lea.sflag [#allocation4], %s477
          %s479 = sand.u32 %s265, 1
          %s480 = smul.addr %s479, 64
          %s481 = scalar_lea.vmem [#allocation16], %s480
          %s483 = ssub.s32 1024, 1024
          %484 = vsyncadd %s478, %s483
          %s485 = smul.addr %s32, 16
          %s486 = smul.addr %s485, 64
          %s487 = scalar_lea.hbm %s9, %s486
          %s488 = sshll.u32 %s481, 4
          %s489 = int_to_ptr.vmem [resolvable:$true] %s488
          %494 = dma.hbm_to_vmem [thread:$0]  %s487, 1024, %s489, %s478, 64, 64, 4
        $region56: #{base_transformer_forward.1} parent=27 // pred_fallthru
          _
      $region28: #{base_transformer_forward.1} parent=5 // pred_fallthru
        _
      %p495 = scmp.le.s32.totalorder 1, %s24
      %p496 = scmp.lt.s32.totalorder %s24, 5
      %p497 = pnand %p495, %p496
      %p498 = pneg %p497
      // Predicated region
      $region57: #{base_transformer_forward.1} parent=5 // pred_check
        _
      $region58: #{base_transformer_forward.1} parent=5 // pred_check_branch
        %500 = sbr.rel (%p497) target = $region60
      $region59: #{base_transformer_forward.1} parent=5 // pred_region
        %s501 = ssub.s32 %s24, 1
        %s502 = sand.u32 %s29, 1
        %s503 = scalar_lea.sflag [#allocation4], %s502
        %s504 = sand.u32 %s49, 1
        %s505 = smul.addr %s504, 8
        %s506 = scalar_lea.vmem [#allocation3], %s505
        // Predicated region
        $region61: #{base_transformer_forward.1} parent=59 // pred_check
          %p507 = pneg %p62
        $region62: #{base_transformer_forward.1} parent=59 // pred_check_branch
          %509 = sbr.rel (%p507) target = $region64
        $region63: #{base_transformer_forward.1} parent=59 // pred_region
          %510 = dma.done %s503, 128
        $region64: #{base_transformer_forward.1} parent=59 // pred_fallthru
          _
        // Predicated region
        $region65: #{base_transformer_forward.1} parent=59 // pred_check
          %p511 = pneg %p83
        $region66: #{base_transformer_forward.1} parent=59 // pred_check_branch
          %513 = sbr.rel (%p511) target = $region68
        $region67: #{base_transformer_forward.1} parent=59 // pred_region
          %514 = dma.done [#allocation7], 128
        $region68: #{base_transformer_forward.1} parent=59 // pred_fallthru
          _
        // Predicated region
        $region69: #{base_transformer_forward.1} parent=59 // pred_check
          %p515 = pneg %p104
        $region70: #{base_transformer_forward.1} parent=59 // pred_check_branch
          %517 = sbr.rel (%p515) target = $region72
        $region71: #{base_transformer_forward.1} parent=59 // pred_region
          %518 = dma.done [#allocation7], 128
        $region72: #{base_transformer_forward.1} parent=59 // pred_fallthru
          _
        // Predicated region
        $region73: #{base_transformer_forward.1} parent=59 // pred_check
          %p519 = pneg %p125
        $region74: #{base_transformer_forward.1} parent=59 // pred_check_branch
          %521 = sbr.rel (%p519) target = $region76
        $region75: #{base_transformer_forward.1} parent=59 // pred_region
          %522 = dma.done [#allocation10], 128
        $region76: #{base_transformer_forward.1} parent=59 // pred_fallthru
          _
        %s523 = sand.u32 %s29, 1
        %s524 = scalar_lea.sflag [#allocation4], %s523
        %s525 = sand.u32 %s138, 1
        %s526 = scalar_lea.vmem [#allocation11], %s525
        // Predicated region
        $region77: #{base_transformer_forward.1} parent=59 // pred_check
          %p527 = pneg %p151
        $region78: #{base_transformer_forward.1} parent=59 // pred_check_branch
          %529 = sbr.rel (%p527) target = $region80
        $region79: #{base_transformer_forward.1} parent=59 // pred_region
          %530 = dma.done %s524, 16
        $region80: #{base_transformer_forward.1} parent=59 // pred_fallthru
          _
        %s531 = sand.u32 %s29, 1
        %s532 = scalar_lea.sflag [#allocation4], %s531
        %s533 = sand.u32 %s164, 1
        %s534 = scalar_lea.vmem [#allocation12], %s533
        // Predicated region
        $region81: #{base_transformer_forward.1} parent=59 // pred_check
          %p535 = pneg %p177
        $region82: #{base_transformer_forward.1} parent=59 // pred_check_branch
          %537 = sbr.rel (%p535) target = $region84
        $region83: #{base_transformer_forward.1} parent=59 // pred_region
          %538 = dma.done %s532, 16
        $region84: #{base_transformer_forward.1} parent=59 // pred_fallthru
          _
        %s539 = sand.u32 %s29, 1
        %s540 = scalar_lea.sflag [#allocation4], %s539
        %s541 = sand.u32 %s190, 1
        %s542 = smul.addr %s541, 16
        %s543 = scalar_lea.vmem [#allocation13], %s542
        // Predicated region
        $region85: #{base_transformer_forward.1} parent=59 // pred_check
          %p544 = pneg %p203
        $region86: #{base_transformer_forward.1} parent=59 // pred_check_branch
          %546 = sbr.rel (%p544) target = $region88
        $region87: #{base_transformer_forward.1} parent=59 // pred_region
          %547 = dma.done %s540, 256
        $region88: #{base_transformer_forward.1} parent=59 // pred_fallthru
          _
        %s548 = sand.u32 %s29, 1
        %s549 = scalar_lea.sflag [#allocation4], %s548
        %s550 = sand.u32 %s216, 1
        %s551 = smul.addr %s550, 16
        %s552 = scalar_lea.vmem [#allocation14], %s551
        // Predicated region
        $region89: #{base_transformer_forward.1} parent=59 // pred_check
          %p553 = pneg %p229
        $region90: #{base_transformer_forward.1} parent=59 // pred_check_branch
          %555 = sbr.rel (%p553) target = $region92
        $region91: #{base_transformer_forward.1} parent=59 // pred_region
          %556 = dma.done %s549, 256
        $region92: #{base_transformer_forward.1} parent=59 // pred_fallthru
          _
        %s557 = sand.u32 %s29, 1
        %s558 = scalar_lea.sflag [#allocation4], %s557
        %s559 = sand.u32 %s242, 1
        %s560 = smul.addr %s559, 16
        %s561 = scalar_lea.vmem [#allocation15], %s560
        // Predicated region
        $region93: #{base_transformer_forward.1} parent=59 // pred_check
          %p562 = pneg %p255
        $region94: #{base_transformer_forward.1} parent=59 // pred_check_branch
          %564 = sbr.rel (%p562) target = $region96
        $region95: #{base_transformer_forward.1} parent=59 // pred_region
          %565 = dma.done %s558, 256
        $region96: #{base_transformer_forward.1} parent=59 // pred_fallthru
          _
        %s566 = sand.u32 %s29, 1
        %s567 = scalar_lea.sflag [#allocation4], %s566
        %s568 = sand.u32 %s268, 1
        %s569 = smul.addr %s568, 64
        %s570 = scalar_lea.vmem [#allocation16], %s569
        // Predicated region
        $region97: #{base_transformer_forward.1} parent=59 // pred_check
          %p571 = pneg %p281
        $region98: #{base_transformer_forward.1} parent=59 // pred_check_branch
          %573 = sbr.rel (%p571) target = $region100
        $region99: #{base_transformer_forward.1} parent=59 // pred_region
          %574 = dma.done %s567, 1024
        $region100: #{base_transformer_forward.1} parent=59 // pred_fallthru
          _
        %s575 = sand.u32 %s29, 1
        %s576 = scalar_lea.sflag [#allocation4], %s575
        %s577 = sand.u32 %s49, 1
        %s578 = smul.addr %s577, 8
        %s579 = scalar_lea.vmem [#allocation3], %s578
        %p580 = pneg %p62
        %p581 = pneg %p59
        %p582 = pneg %p83
        %p583 = pneg %p80
        %p584 = pneg %p104
        %p585 = pneg %p101
        %p586 = pneg %p125
        %p587 = pneg %p122
        %s588 = sand.u32 %s29, 1
        %s589 = scalar_lea.sflag [#allocation4], %s588
        %s590 = sand.u32 %s138, 1
        %s591 = scalar_lea.vmem [#allocation11], %s590
        %p592 = pneg %p151
        %p593 = pneg %p148
        %s594 = sand.u32 %s29, 1
        %s595 = scalar_lea.sflag [#allocation4], %s594
        %s596 = sand.u32 %s164, 1
        %s597 = scalar_lea.vmem [#allocation12], %s596
        %p598 = pneg %p177
        %p599 = pneg %p174
        %s600 = sand.u32 %s29, 1
        %s601 = scalar_lea.sflag [#allocation4], %s600
        %s602 = sand.u32 %s190, 1
        %s603 = smul.addr %s602, 16
        %s604 = scalar_lea.vmem [#allocation13], %s603
        %p605 = pneg %p203
        %p606 = pneg %p200
        %s607 = sand.u32 %s29, 1
        %s608 = scalar_lea.sflag [#allocation4], %s607
        %s609 = sand.u32 %s216, 1
        %s610 = smul.addr %s609, 16
        %s611 = scalar_lea.vmem [#allocation14], %s610
        %p612 = pneg %p229
        %p613 = pneg %p226
        %s614 = sand.u32 %s29, 1
        %s615 = scalar_lea.sflag [#allocation4], %s614
        %s616 = sand.u32 %s242, 1
        %s617 = smul.addr %s616, 16
        %s618 = scalar_lea.vmem [#allocation15], %s617
        %p619 = pneg %p255
        %p620 = pneg %p252
        %s621 = sand.u32 %s29, 1
        %s622 = scalar_lea.sflag [#allocation4], %s621
        %s623 = sand.u32 %s268, 1
        %s624 = smul.addr %s623, 64
        %s625 = scalar_lea.vmem [#allocation16], %s624
        %p626 = pneg %p281
        %p627 = pneg %p278
        %p628 = pneg %p307
        %p629 = pneg %p304
        %s630 = sand.u32 %s294, 1
        %s631 = scalar_lea.sflag [#allocation5], %s630
        %s632 = sand.u32 %s294, 1
        %s633 = smul.addr %s632, 8
        %s634 = scalar_lea.vmem [#allocation17], %s633
        %p636 = scmp.eq.s32.totalorder %s34, 0
        // Predicated region
        $region101: #{base_transformer_forward.1} parent=59 // pred_check
          %p637 = pneg %p636
        $region102: #{base_transformer_forward.1} parent=59 // pred_check_branch
          %639 = sbr.rel (%p637) target = $region104
        $region103: #{base_transformer_forward.1} parent=59 // pred_region
          %v640 = vld [vmem:[%s506] sm:$0xff]
          %vm641 = vcmask 261120
          %642 = vst.msk [vmem:[%s634] sm:$0xff] %vm641, %v640
        $region104: #{base_transformer_forward.1} parent=59 // pred_fallthru
          _
        %v643 = vld [vmem:[%s634] sm:$0xff]
        %v644 = vld [vmem:[%s526] sm:$0x1]
        %v645 = vmul.f32 %v643, %v643
        %vm646 = vcmask 261120
        %v647 = vsel %vm646, %v645, 0.0
        %648 = vadd.xlane.f32.xlu0 %v647
        %v649 = vpop.xlane.xlu0 %648
        %v650 = vrcp.pop 32.0
        %v651 = vmul.f32 %v649, %v650
        %v652 = vadd.f32 %v651, 1e-06
        %v653 = vrsqrt.pop %v652
        %v654 = vmul.f32 %v643, %v653
        %v656 = vlaneseq
        %v657 = vshrl.u32 %v656, 7
        %v658 = vsub.s32 0, %v657
        %v659 = vrot.slane %v644, %v658
        %v661 = vmul.f32 %v654, %v659
        %v662 = vld [vmem:[%s543] sm:$0xf]
        %v663 = vld [vmem:[%s543 + $0x4] sm:$0xf]
        %v664 = vld [vmem:[%s543 + $0x8] sm:$0xf]
        %v665 = vld [vmem:[%s543 + $0xc] sm:$0xf]
        %v666 = vpack.c.bf16 %v661, %v661
        %v671 = vunpack.c.l.b16 %v662
        %v672 = vunpack.c.l.b16 %v663
        %v673 = vunpack.c.l.b16 %v664
        %v674 = vunpack.c.l.b16 %v665
        %v675 = vpack.c.b16 %v672, %v671
        %v676 = vpack.c.b16 %v674, %v673
        %v680 = vsel %vm646, %v666, 0
        %682 = vmatprep.subr.bf16.mxu0 0
        %683 = vmatpush1.bf16.msra.mxu0 %v675
        %684 = vmatprep.subr.bf16.mxu0 0
        %685 = vmatpush1.bf16.msra.mxu0 %v676
        %686 = vmatprep.subr.bf16.mxu0 0
        %687 = vmatpush1.bf16.msra.mxu0 0
        %688 = vmatprep.subr.bf16.mxu0 0
        %689 = vmatpush1.bf16.msra.mxu0 0
        %690 = vmatprep.subr.bf16.mxu0 0
        %691 = vmatpush1.bf16.msra.mxu0 0
        %692 = vmatprep.subr.bf16.mxu0 0
        %693 = vmatpush1.bf16.msra.mxu0 0
        %694 = vmatprep.subr.bf16.mxu0 0
        %695 = vmatpush1.bf16.msra.mxu0 0
        %696 = vmatprep.subr.bf16.mxu0 0
        %697 = vmatpush1.bf16.msra.mxu0 0
        %698 = vmatprep.subr.bf16.mxu0 0
        %699 = vmatpush1.bf16.msra.mxu0 0
        %700 = vmatprep.subr.bf16.mxu0 0
        %701 = vmatpush1.bf16.msra.mxu0 0
        %702 = vmatprep.subr.bf16.mxu0 0
        %703 = vmatpush1.bf16.msra.mxu0 0
        %704 = vmatprep.subr.bf16.mxu0 0
        %705 = vmatpush1.bf16.msra.mxu0 0
        %706 = vmatprep.subr.bf16.mxu0 0
        %707 = vmatpush1.bf16.msra.mxu0 0
        %708 = vmatprep.subr.bf16.mxu0 0
        %709 = vmatpush1.bf16.msra.mxu0 0
        %710 = vmatprep.subr.bf16.mxu0 0
        %711 = vmatpush1.bf16.msra.mxu0 0
        %712 = vmatprep.subr.bf16.mxu0 0
        %713 = vmatpush1.bf16.msra.mxu0 0
        %714 = vmatprep.mubr.bf16.mxu0 0
        %715 = vmatmul.mubr.bf16.gmra.mrb[0].mxu0 %v680
        %v716 = vpop.f32.mrb[0].mxu0
        %v717 = vadd.f32 0.0, %v716
        %v718 = vpop.f32.mrb[0].mxu0
        %v719 = vpop.f32.mrb[0].mxu0
        %v720 = vpop.f32.mrb[0].mxu0
        %721 = vdwg.mxu0
        %v722 = vld [vmem:[#allocation6] sm:$0xff]
        %v723 = vmul.f32 %v717, %v722
        %725 = vrot.lane.b32.xlu0 %v717, 127
        %v726 = vpop.permute.xlu0 %725
        %vm728 = vcmask 515072
        %v729 = vsel %vm728, %v726, 0.0
        %v730 = vld [vmem:[#allocation8] sm:$0xff]
        %v731 = vmul.f32 %v729, %v730
        %v732 = vadd.f32 %v723, %v731
        %733 = vrot.lane.b32.xlu0 %v717, 1
        %v734 = vpop.permute.xlu0 %733
        %vm736 = vcmask 7168
        %v737 = vsel %vm736, 0.0, %v734
        %v738 = vld [vmem:[#allocation9] sm:$0xff]
        %v739 = vmul.f32 %v737, %v738
        %v740 = vadd.f32 %v732, %v739
        %v741 = vpack.c.bf16 %v740, %v740
        %v742 = vpack.c.bf16 %v717, %v717
        %744 = vrot.lane.b32.xlu0 %v741, 96
        %v745 = vpop.permute.xlu0 %744
        %vm746 = vcmask 64512
        %v748 = vsel %vm746, %v741, 0
        %v751 = vsel %vm746, %v745, 0
        %753 = vmatprep.subr.bf16.mxu0 0
        %754 = vmatpush1.bf16.xpose.msra.mxu0 %v751
        %755 = vmatprep.subr.bf16.mxu0 0
        %756 = vmatpush1.bf16.xpose.msra.mxu0 0
        %757 = vmatprep.subr.bf16.mxu0 0
        %758 = vmatpush1.bf16.xpose.msra.mxu0 0
        %759 = vmatprep.subr.bf16.mxu0 0
        %760 = vmatpush1.bf16.xpose.msra.mxu0 0
        %761 = vmatprep.subr.bf16.mxu0 0
        %762 = vmatpush1.bf16.xpose.msra.mxu0 0
        %763 = vmatprep.subr.bf16.mxu0 0
        %764 = vmatpush1.bf16.xpose.msra.mxu0 0
        %765 = vmatprep.subr.bf16.mxu0 0
        %766 = vmatpush1.bf16.xpose.msra.mxu0 0
        %767 = vmatprep.subr.bf16.mxu0 0
        %768 = vmatpush1.bf16.xpose.msra.mxu0 0
        %769 = vmatprep.subr.bf16.mxu0 0
        %770 = vmatpush1.bf16.xpose.msra.mxu0 0
        %771 = vmatprep.subr.bf16.mxu0 0
        %772 = vmatpush1.bf16.xpose.msra.mxu0 0
        %773 = vmatprep.subr.bf16.mxu0 0
        %774 = vmatpush1.bf16.xpose.msra.mxu0 0
        %775 = vmatprep.subr.bf16.mxu0 0
        %776 = vmatpush1.bf16.xpose.msra.mxu0 0
        %777 = vmatprep.subr.bf16.mxu0 0
        %778 = vmatpush1.bf16.xpose.msra.mxu0 0
        %779 = vmatprep.subr.bf16.mxu0 0
        %780 = vmatpush1.bf16.xpose.msra.mxu0 0
        %781 = vmatprep.subr.bf16.mxu0 0
        %782 = vmatpush1.bf16.xpose.msra.mxu0 0
        %783 = vmatprep.subr.bf16.mxu0 0
        %784 = vmatpush1.bf16.xpose.msra.mxu0 0
        %785 = vmatprep.mubr.bf16.mxu0 0
        %786 = vmatmul.mubr.bf16.gmra.mrb[0].mxu0 %v748
        %v787 = vpop.f32.mrb[0].mxu0
        %v788 = vadd.f32 0.0, %v787
        %v789 = vpop.f32.mrb[0].mxu0
        %v790 = vpop.f32.mrb[0].mxu0
        %v791 = vpop.f32.mrb[0].mxu0
        %792 = vdwg.mxu0
        %v793 = vmul.f32 %v788, 0.35355338
        %v794 = vsel %vm746, %v793, -inf
        %795 = vmax.xlane.f32.xlu0 %v794
        %v796 = vpop.xlane.xlu0 %795
        %v797 = vsub.f32 %v793, %v796
        %v798 = vmul.f32 %v797, 1.442695
        %v799 = vpow.pop %v798
        %v800 = vsel %vm746, %v799, 0.0
        %801 = vadd.xlane.f32.xlu0 %v800
        %v802 = vpop.xlane.xlu0 %801
        %v803 = vrcp.pop %v802
        %v804 = vmul.f32 %v799, %v803
        %v805 = vpack.c.bf16 %v804, %v804
        %807 = vrot.lane.b32.xlu0 %v742, 64
        %v808 = vpop.permute.xlu0 %807
        %v810 = vsel %vm746, %v805, 0
        %vm812 = vcmask 1043456
        %v814 = vsel %vm812, %v808, 0
        %816 = vmatprep.subr.bf16.mxu0 0
        %817 = vmatpush1.bf16.msra.mxu0 %v814
        %818 = vmatprep.subr.bf16.mxu0 0
        %819 = vmatpush1.bf16.msra.mxu0 0
        %820 = vmatprep.subr.bf16.mxu0 0
        %821 = vmatpush1.bf16.msra.mxu0 0
        %822 = vmatprep.subr.bf16.mxu0 0
        %823 = vmatpush1.bf16.msra.mxu0 0
        %824 = vmatprep.subr.bf16.mxu0 0
        %825 = vmatpush1.bf16.msra.mxu0 0
        %826 = vmatprep.subr.bf16.mxu0 0
        %827 = vmatpush1.bf16.msra.mxu0 0
        %828 = vmatprep.subr.bf16.mxu0 0
        %829 = vmatpush1.bf16.msra.mxu0 0
        %830 = vmatprep.subr.bf16.mxu0 0
        %831 = vmatpush1.bf16.msra.mxu0 0
        %832 = vmatprep.subr.bf16.mxu0 0
        %833 = vmatpush1.bf16.msra.mxu0 0
        %834 = vmatprep.subr.bf16.mxu0 0
        %835 = vmatpush1.bf16.msra.mxu0 0
        %836 = vmatprep.subr.bf16.mxu0 0
        %837 = vmatpush1.bf16.msra.mxu0 0
        %838 = vmatprep.subr.bf16.mxu0 0
        %839 = vmatpush1.bf16.msra.mxu0 0
        %840 = vmatprep.subr.bf16.mxu0 0
        %841 = vmatpush1.bf16.msra.mxu0 0
        %842 = vmatprep.subr.bf16.mxu0 0
        %843 = vmatpush1.bf16.msra.mxu0 0
        %844 = vmatprep.subr.bf16.mxu0 0
        %845 = vmatpush1.bf16.msra.mxu0 0
        %846 = vmatprep.subr.bf16.mxu0 0
        %847 = vmatpush1.bf16.msra.mxu0 0
        %848 = vmatprep.mubr.bf16.mxu0 0
        %849 = vmatmul.mubr.bf16.gmra.mrb[0].mxu0 %v810
        %v850 = vpop.f32.mrb[0].mxu0
        %v851 = vadd.f32 0.0, %v850
        %v852 = vpop.f32.mrb[0].mxu0
        %v853 = vpop.f32.mrb[0].mxu0
        %v854 = vpop.f32.mrb[0].mxu0
        %855 = vdwg.mxu0
        %856 = vst.msk [vmem:[#allocation2] sm:$0xff] %vm746, %v851
        %857 = vrot.lane.b32.xlu0 %v741, 120
        %v858 = vpop.permute.xlu0 %857
        %859 = vrot.lane.b32.xlu0 %v741, 88
        %v860 = vpop.permute.xlu0 %859
        %v862 = vsel %vm746, %v858, 0
        %v865 = vsel %vm746, %v860, 0
        %867 = vmatprep.subr.bf16.mxu0 0
        %868 = vmatpush1.bf16.xpose.msra.mxu0 %v865
        %869 = vmatprep.subr.bf16.mxu0 0
        %870 = vmatpush1.bf16.xpose.msra.mxu0 0
        %871 = vmatprep.subr.bf16.mxu0 0
        %872 = vmatpush1.bf16.xpose.msra.mxu0 0
        %873 = vmatprep.subr.bf16.mxu0 0
        %874 = vmatpush1.bf16.xpose.msra.mxu0 0
        %875 = vmatprep.subr.bf16.mxu0 0
        %876 = vmatpush1.bf16.xpose.msra.mxu0 0
        %877 = vmatprep.subr.bf16.mxu0 0
        %878 = vmatpush1.bf16.xpose.msra.mxu0 0
        %879 = vmatprep.subr.bf16.mxu0 0
        %880 = vmatpush1.bf16.xpose.msra.mxu0 0
        %881 = vmatprep.subr.bf16.mxu0 0
        %882 = vmatpush1.bf16.xpose.msra.mxu0 0
        %883 = vmatprep.subr.bf16.mxu0 0
        %884 = vmatpush1.bf16.xpose.msra.mxu0 0
        %885 = vmatprep.subr.bf16.mxu0 0
        %886 = vmatpush1.bf16.xpose.msra.mxu0 0
        %887 = vmatprep.subr.bf16.mxu0 0
        %888 = vmatpush1.bf16.xpose.msra.mxu0 0
        %889 = vmatprep.subr.bf16.mxu0 0
        %890 = vmatpush1.bf16.xpose.msra.mxu0 0
        %891 = vmatprep.subr.bf16.mxu0 0
        %892 = vmatpush1.bf16.xpose.msra.mxu0 0
        %893 = vmatprep.subr.bf16.mxu0 0
        %894 = vmatpush1.bf16.xpose.msra.mxu0 0
        %895 = vmatprep.subr.bf16.mxu0 0
        %896 = vmatpush1.bf16.xpose.msra.mxu0 0
        %897 = vmatprep.subr.bf16.mxu0 0
        %898 = vmatpush1.bf16.xpose.msra.mxu0 0
        %899 = vmatprep.mubr.bf16.mxu0 0
        %900 = vmatmul.mubr.bf16.gmra.mrb[0].mxu0 %v862
        %v901 = vpop.f32.mrb[0].mxu0
        %v902 = vadd.f32 0.0, %v901
        %v903 = vpop.f32.mrb[0].mxu0
        %v904 = vpop.f32.mrb[0].mxu0
        %v905 = vpop.f32.mrb[0].mxu0
        %906 = vdwg.mxu0
        %v907 = vmul.f32 %v902, 0.35355338
        %v908 = vsel %vm746, %v907, -inf
        %909 = vmax.xlane.f32.xlu0 %v908
        %v910 = vpop.xlane.xlu0 %909
        %v911 = vsub.f32 %v907, %v910
        %v912 = vmul.f32 %v911, 1.442695
        %v913 = vpow.pop %v912
        %v914 = vsel %vm746, %v913, 0.0
        %915 = vadd.xlane.f32.xlu0 %v914
        %v916 = vpop.xlane.xlu0 %915
        %v917 = vrcp.pop %v916
        %v918 = vmul.f32 %v913, %v917
        %v919 = vpack.c.bf16 %v918, %v918
        %920 = vrot.lane.b32.xlu0 %v742, 56
        %v921 = vpop.permute.xlu0 %920
        %v923 = vsel %vm746, %v919, 0
        %v926 = vsel %vm812, %v921, 0
        %928 = vmatprep.subr.bf16.mxu0 0
        %929 = vmatpush1.bf16.msra.mxu0 %v926
        %930 = vmatprep.subr.bf16.mxu0 0
        %931 = vmatpush1.bf16.msra.mxu0 0
        %932 = vmatprep.subr.bf16.mxu0 0
        %933 = vmatpush1.bf16.msra.mxu0 0
        %934 = vmatprep.subr.bf16.mxu0 0
        %935 = vmatpush1.bf16.msra.mxu0 0
        %936 = vmatprep.subr.bf16.mxu0 0
        %937 = vmatpush1.bf16.msra.mxu0 0
        %938 = vmatprep.subr.bf16.mxu0 0
        %939 = vmatpush1.bf16.msra.mxu0 0
        %940 = vmatprep.subr.bf16.mxu0 0
        %941 = vmatpush1.bf16.msra.mxu0 0
        %942 = vmatprep.subr.bf16.mxu0 0
        %943 = vmatpush1.bf16.msra.mxu0 0
        %944 = vmatprep.subr.bf16.mxu0 0
        %945 = vmatpush1.bf16.msra.mxu0 0
        %946 = vmatprep.subr.bf16.mxu0 0
        %947 = vmatpush1.bf16.msra.mxu0 0
        %948 = vmatprep.subr.bf16.mxu0 0
        %949 = vmatpush1.bf16.msra.mxu0 0
        %950 = vmatprep.subr.bf16.mxu0 0
        %951 = vmatpush1.bf16.msra.mxu0 0
        %952 = vmatprep.subr.bf16.mxu0 0
        %953 = vmatpush1.bf16.msra.mxu0 0
        %954 = vmatprep.subr.bf16.mxu0 0
        %955 = vmatpush1.bf16.msra.mxu0 0
        %956 = vmatprep.subr.bf16.mxu0 0
        %957 = vmatpush1.bf16.msra.mxu0 0
        %958 = vmatprep.subr.bf16.mxu0 0
        %959 = vmatpush1.bf16.msra.mxu0 0
        %960 = vmatprep.mubr.bf16.mxu0 0
        %961 = vmatmul.mubr.bf16.gmra.mrb[0].mxu0 %v923
        %v962 = vpop.f32.mrb[0].mxu0
        %v963 = vadd.f32 0.0, %v962
        %v964 = vpop.f32.mrb[0].mxu0
        %v965 = vpop.f32.mrb[0].mxu0
        %v966 = vpop.f32.mrb[0].mxu0
        %967 = vdwg.mxu0
        %969 = vrot.lane.b32.xlu0 %v963, 8
        %v970 = vpop.permute.xlu0 %969
        %vm972 = vcmask 130112
        %973 = vst.msk [vmem:[#allocation2] sm:$0xff] %vm972, %v970
        %974 = vrot.lane.b32.xlu0 %v741, 112
        %v975 = vpop.permute.xlu0 %974
        %976 = vrot.lane.b32.xlu0 %v741, 80
        %v977 = vpop.permute.xlu0 %976
        %v979 = vsel %vm746, %v975, 0
        %v982 = vsel %vm746, %v977, 0
        %984 = vmatprep.subr.bf16.mxu0 0
        %985 = vmatpush1.bf16.xpose.msra.mxu0 %v982
        %986 = vmatprep.subr.bf16.mxu0 0
        %987 = vmatpush1.bf16.xpose.msra.mxu0 0
        %988 = vmatprep.subr.bf16.mxu0 0
        %989 = vmatpush1.bf16.xpose.msra.mxu0 0
        %990 = vmatprep.subr.bf16.mxu0 0
        %991 = vmatpush1.bf16.xpose.msra.mxu0 0
        %992 = vmatprep.subr.bf16.mxu0 0
        %993 = vmatpush1.bf16.xpose.msra.mxu0 0
        %994 = vmatprep.subr.bf16.mxu0 0
        %995 = vmatpush1.bf16.xpose.msra.mxu0 0
        %996 = vmatprep.subr.bf16.mxu0 0
        %997 = vmatpush1.bf16.xpose.msra.mxu0 0
        %998 = vmatprep.subr.bf16.mxu0 0
        %999 = vmatpush1.bf16.xpose.msra.mxu0 0
        %1000 = vmatprep.subr.bf16.mxu0 0
        %1001 = vmatpush1.bf16.xpose.msra.mxu0 0
        %1002 = vmatprep.subr.bf16.mxu0 0
        %1003 = vmatpush1.bf16.xpose.msra.mxu0 0
        %1004 = vmatprep.subr.bf16.mxu0 0
        %1005 = vmatpush1.bf16.xpose.msra.mxu0 0
        %1006 = vmatprep.subr.bf16.mxu0 0
        %1007 = vmatpush1.bf16.xpose.msra.mxu0 0
        %1008 = vmatprep.subr.bf16.mxu0 0
        %1009 = vmatpush1.bf16.xpose.msra.mxu0 0
        %1010 = vmatprep.subr.bf16.mxu0 0
        %1011 = vmatpush1.bf16.xpose.msra.mxu0 0
        %1012 = vmatprep.subr.bf16.mxu0 0
        %1013 = vmatpush1.bf16.xpose.msra.mxu0 0
        %1014 = vmatprep.subr.bf16.mxu0 0
        %1015 = vmatpush1.bf16.xpose.msra.mxu0 0
        %1016 = vmatprep.mubr.bf16.mxu0 0
        %1017 = vmatmul.mubr.bf16.gmra.mrb[0].mxu0 %v979
        %v1018 = vpop.f32.mrb[0].mxu0
        %v1019 = vadd.f32 0.0, %v1018
        %v1020 = vpop.f32.mrb[0].mxu0
        %v1021 = vpop.f32.mrb[0].mxu0
        %v1022 = vpop.f32.mrb[0].mxu0
        %1023 = vdwg.mxu0
        %v1024 = vmul.f32 %v1019, 0.35355338
        %v1025 = vsel %vm746, %v1024, -inf
        %1026 = vmax.xlane.f32.xlu0 %v1025
        %v1027 = vpop.xlane.xlu0 %1026
        %v1028 = vsub.f32 %v1024, %v1027
        %v1029 = vmul.f32 %v1028, 1.442695
        %v1030 = vpow.pop %v1029
        %v1031 = vsel %vm746, %v1030, 0.0
        %1032 = vadd.xlane.f32.xlu0 %v1031
        %v1033 = vpop.xlane.xlu0 %1032
        %v1034 = vrcp.pop %v1033
        %v1035 = vmul.f32 %v1030, %v1034
        %v1036 = vpack.c.bf16 %v1035, %v1035
        %1037 = vrot.lane.b32.xlu0 %v742, 48
        %v1038 = vpop.permute.xlu0 %1037
        %v1040 = vsel %vm746, %v1036, 0
        %v1043 = vsel %vm812, %v1038, 0
        %1045 = vmatprep.subr.bf16.mxu0 0
        %1046 = vmatpush1.bf16.msra.mxu0 %v1043
        %1047 = vmatprep.subr.bf16.mxu0 0
        %1048 = vmatpush1.bf16.msra.mxu0 0
        %1049 = vmatprep.subr.bf16.mxu0 0
        %1050 = vmatpush1.bf16.msra.mxu0 0
        %1051 = vmatprep.subr.bf16.mxu0 0
        %1052 = vmatpush1.bf16.msra.mxu0 0
        %1053 = vmatprep.subr.bf16.mxu0 0
        %1054 = vmatpush1.bf16.msra.mxu0 0
        %1055 = vmatprep.subr.bf16.mxu0 0
        %1056 = vmatpush1.bf16.msra.mxu0 0
        %1057 = vmatprep.subr.bf16.mxu0 0
        %1058 = vmatpush1.bf16.msra.mxu0 0
        %1059 = vmatprep.subr.bf16.mxu0 0
        %1060 = vmatpush1.bf16.msra.mxu0 0
        %1061 = vmatprep.subr.bf16.mxu0 0
        %1062 = vmatpush1.bf16.msra.mxu0 0
        %1063 = vmatprep.subr.bf16.mxu0 0
        %1064 = vmatpush1.bf16.msra.mxu0 0
        %1065 = vmatprep.subr.bf16.mxu0 0
        %1066 = vmatpush1.bf16.msra.mxu0 0
        %1067 = vmatprep.subr.bf16.mxu0 0
        %1068 = vmatpush1.bf16.msra.mxu0 0
        %1069 = vmatprep.subr.bf16.mxu0 0
        %1070 = vmatpush1.bf16.msra.mxu0 0
        %1071 = vmatprep.subr.bf16.mxu0 0
        %1072 = vmatpush1.bf16.msra.mxu0 0
        %1073 = vmatprep.subr.bf16.mxu0 0
        %1074 = vmatpush1.bf16.msra.mxu0 0
        %1075 = vmatprep.subr.bf16.mxu0 0
        %1076 = vmatpush1.bf16.msra.mxu0 0
        %1077 = vmatprep.mubr.bf16.mxu0 0
        %1078 = vmatmul.mubr.bf16.gmra.mrb[0].mxu0 %v1040
        %v1079 = vpop.f32.mrb[0].mxu0
        %v1080 = vadd.f32 0.0, %v1079
        %v1081 = vpop.f32.mrb[0].mxu0
        %v1082 = vpop.f32.mrb[0].mxu0
        %v1083 = vpop.f32.mrb[0].mxu0
        %1084 = vdwg.mxu0
        %1086 = vrot.lane.b32.xlu0 %v1080, 16
        %v1087 = vpop.permute.xlu0 %1086
        %vm1089 = vcmask 195712
        %1090 = vst.msk [vmem:[#allocation2] sm:$0xff] %vm1089, %v1087
        %1091 = vrot.lane.b32.xlu0 %v741, 104
        %v1092 = vpop.permute.xlu0 %1091
        %1093 = vrot.lane.b32.xlu0 %v741, 72
        %v1094 = vpop.permute.xlu0 %1093
        %v1096 = vsel %vm746, %v1092, 0
        %v1099 = vsel %vm746, %v1094, 0
        %1101 = vmatprep.subr.bf16.mxu0 0
        %1102 = vmatpush1.bf16.xpose.msra.mxu0 %v1099
        %1103 = vmatprep.subr.bf16.mxu0 0
        %1104 = vmatpush1.bf16.xpose.msra.mxu0 0
        %1105 = vmatprep.subr.bf16.mxu0 0
        %1106 = vmatpush1.bf16.xpose.msra.mxu0 0
        %1107 = vmatprep.subr.bf16.mxu0 0
        %1108 = vmatpush1.bf16.xpose.msra.mxu0 0
        %1109 = vmatprep.subr.bf16.mxu0 0
        %1110 = vmatpush1.bf16.xpose.msra.mxu0 0
        %1111 = vmatprep.subr.bf16.mxu0 0
        %1112 = vmatpush1.bf16.xpose.msra.mxu0 0
        %1113 = vmatprep.subr.bf16.mxu0 0
        %1114 = vmatpush1.bf16.xpose.msra.mxu0 0
        %1115 = vmatprep.subr.bf16.mxu0 0
        %1116 = vmatpush1.bf16.xpose.msra.mxu0 0
        %1117 = vmatprep.subr.bf16.mxu0 0
        %1118 = vmatpush1.bf16.xpose.msra.mxu0 0
        %1119 = vmatprep.subr.bf16.mxu0 0
        %1120 = vmatpush1.bf16.xpose.msra.mxu0 0
        %1121 = vmatprep.subr.bf16.mxu0 0
        %1122 = vmatpush1.bf16.xpose.msra.mxu0 0
        %1123 = vmatprep.subr.bf16.mxu0 0
        %1124 = vmatpush1.bf16.xpose.msra.mxu0 0
        %1125 = vmatprep.subr.bf16.mxu0 0
        %1126 = vmatpush1.bf16.xpose.msra.mxu0 0
        %1127 = vmatprep.subr.bf16.mxu0 0
        %1128 = vmatpush1.bf16.xpose.msra.mxu0 0
        %1129 = vmatprep.subr.bf16.mxu0 0
        %1130 = vmatpush1.bf16.xpose.msra.mxu0 0
        %1131 = vmatprep.subr.bf16.mxu0 0
        %1132 = vmatpush1.bf16.xpose.msra.mxu0 0
        %1133 = vmatprep.mubr.bf16.mxu0 0
        %1134 = vmatmul.mubr.bf16.gmra.mrb[0].mxu0 %v1096
        %v1135 = vpop.f32.mrb[0].mxu0
        %v1136 = vadd.f32 0.0, %v1135
        %v1137 = vpop.f32.mrb[0].mxu0
        %v1138 = vpop.f32.mrb[0].mxu0
        %v1139 = vpop.f32.mrb[0].mxu0
        %1140 = vdwg.mxu0
        %v1141 = vmul.f32 %v1136, 0.35355338
        %v1142 = vsel %vm746, %v1141, -inf
        %1143 = vmax.xlane.f32.xlu0 %v1142
        %v1144 = vpop.xlane.xlu0 %1143
        %v1145 = vsub.f32 %v1141, %v1144
        %v1146 = vmul.f32 %v1145, 1.442695
        %v1147 = vpow.pop %v1146
        %v1148 = vsel %vm746, %v1147, 0.0
        %1149 = vadd.xlane.f32.xlu0 %v1148
        %v1150 = vpop.xlane.xlu0 %1149
        %v1151 = vrcp.pop %v1150
        %v1152 = vmul.f32 %v1147, %v1151
        %v1153 = vpack.c.bf16 %v1152, %v1152
        %1154 = vrot.lane.b32.xlu0 %v742, 40
        %v1155 = vpop.permute.xlu0 %1154
        %v1157 = vsel %vm746, %v1153, 0
        %v1160 = vsel %vm812, %v1155, 0
        %1162 = vmatprep.subr.bf16.mxu0 0
        %1163 = vmatpush1.bf16.msra.mxu0 %v1160
        %1164 = vmatprep.subr.bf16.mxu0 0
        %1165 = vmatpush1.bf16.msra.mxu0 0
        %1166 = vmatprep.subr.bf16.mxu0 0
        %1167 = vmatpush1.bf16.msra.mxu0 0
        %1168 = vmatprep.subr.bf16.mxu0 0
        %1169 = vmatpush1.bf16.msra.mxu0 0
        %1170 = vmatprep.subr.bf16.mxu0 0
        %1171 = vmatpush1.bf16.msra.mxu0 0
        %1172 = vmatprep.subr.bf16.mxu0 0
        %1173 = vmatpush1.bf16.msra.mxu0 0
        %1174 = vmatprep.subr.bf16.mxu0 0
        %1175 = vmatpush1.bf16.msra.mxu0 0
        %1176 = vmatprep.subr.bf16.mxu0 0
        %1177 = vmatpush1.bf16.msra.mxu0 0
        %1178 = vmatprep.subr.bf16.mxu0 0
        %1179 = vmatpush1.bf16.msra.mxu0 0
        %1180 = vmatprep.subr.bf16.mxu0 0
        %1181 = vmatpush1.bf16.msra.mxu0 0
        %1182 = vmatprep.subr.bf16.mxu0 0
        %1183 = vmatpush1.bf16.msra.mxu0 0
        %1184 = vmatprep.subr.bf16.mxu0 0
        %1185 = vmatpush1.bf16.msra.mxu0 0
        %1186 = vmatprep.subr.bf16.mxu0 0
        %1187 = vmatpush1.bf16.msra.mxu0 0
        %1188 = vmatprep.subr.bf16.mxu0 0
        %1189 = vmatpush1.bf16.msra.mxu0 0
        %1190 = vmatprep.subr.bf16.mxu0 0
        %1191 = vmatpush1.bf16.msra.mxu0 0
        %1192 = vmatprep.subr.bf16.mxu0 0
        %1193 = vmatpush1.bf16.msra.mxu0 0
        %1194 = vmatprep.mubr.bf16.mxu0 0
        %1195 = vmatmul.mubr.bf16.gmra.mrb[0].mxu0 %v1157
        %v1196 = vpop.f32.mrb[0].mxu0
        %v1197 = vadd.f32 0.0, %v1196
        %v1198 = vpop.f32.mrb[0].mxu0
        %v1199 = vpop.f32.mrb[0].mxu0
        %v1200 = vpop.f32.mrb[0].mxu0
        %1201 = vdwg.mxu0
        %1203 = vrot.lane.b32.xlu0 %v1197, 24
        %v1204 = vpop.permute.xlu0 %1203
        %vm1206 = vcmask 261312
        %1207 = vst.msk [vmem:[#allocation2] sm:$0xff] %vm1206, %v1204
        %v1208 = vld [vmem:[#allocation2] sm:$0xff]
        %v1209 = vld [vmem:[%s552] sm:$0xf]
        %v1210 = vld [vmem:[%s552 + $0x4] sm:$0xf]
        %v1211 = vld [vmem:[%s552 + $0x8] sm:$0xf]
        %v1212 = vld [vmem:[%s552 + $0xc] sm:$0xf]
        %v1213 = vpack.c.bf16 %v1208, %v1208
        %v1218 = vunpack.c.l.b16 %v1209
        %v1219 = vunpack.c.l.b16 %v1210
        %v1220 = vunpack.c.l.b16 %v1211
        %v1221 = vunpack.c.l.b16 %v1212
        %v1222 = vpack.c.b16 %v1219, %v1218
        %v1223 = vpack.c.b16 %v1221, %v1220
        %v1227 = vsel %vm646, %v1213, 0
        %1229 = vmatprep.subr.bf16.mxu0 0
        %1230 = vmatpush1.bf16.msra.mxu0 %v1222
        %1231 = vmatprep.subr.bf16.mxu0 0
        %1232 = vmatpush1.bf16.msra.mxu0 %v1223
        %1233 = vmatprep.subr.bf16.mxu0 0
        %1234 = vmatpush1.bf16.msra.mxu0 0
        %1235 = vmatprep.subr.bf16.mxu0 0
        %1236 = vmatpush1.bf16.msra.mxu0 0
        %1237 = vmatprep.subr.bf16.mxu0 0
        %1238 = vmatpush1.bf16.msra.mxu0 0
        %1239 = vmatprep.subr.bf16.mxu0 0
        %1240 = vmatpush1.bf16.msra.mxu0 0
        %1241 = vmatprep.subr.bf16.mxu0 0
        %1242 = vmatpush1.bf16.msra.mxu0 0
        %1243 = vmatprep.subr.bf16.mxu0 0
        %1244 = vmatpush1.bf16.msra.mxu0 0
        %1245 = vmatprep.subr.bf16.mxu0 0
        %1246 = vmatpush1.bf16.msra.mxu0 0
        %1247 = vmatprep.subr.bf16.mxu0 0
        %1248 = vmatpush1.bf16.msra.mxu0 0
        %1249 = vmatprep.subr.bf16.mxu0 0
        %1250 = vmatpush1.bf16.msra.mxu0 0
        %1251 = vmatprep.subr.bf16.mxu0 0
        %1252 = vmatpush1.bf16.msra.mxu0 0
        %1253 = vmatprep.subr.bf16.mxu0 0
        %1254 = vmatpush1.bf16.msra.mxu0 0
        %1255 = vmatprep.subr.bf16.mxu0 0
        %1256 = vmatpush1.bf16.msra.mxu0 0
        %1257 = vmatprep.subr.bf16.mxu0 0
        %1258 = vmatpush1.bf16.msra.mxu0 0
        %1259 = vmatprep.subr.bf16.mxu0 0
        %1260 = vmatpush1.bf16.msra.mxu0 0
        %1261 = vmatprep.mubr.bf16.mxu0 0
        %1262 = vmatmul.mubr.bf16.gmra.mrb[0].mxu0 %v1227
        %v1263 = vpop.f32.mrb[0].mxu0
        %v1264 = vadd.f32 0.0, %v1263
        %v1265 = vpop.f32.mrb[0].mxu0
        %v1266 = vpop.f32.mrb[0].mxu0
        %v1267 = vpop.f32.mrb[0].mxu0
        %1268 = vdwg.mxu0
        %v1269 = vadd.f32 %v643, %v1264
        %v1270 = vld [vmem:[%s534] sm:$0x1]
        %v1271 = vmul.f32 %v1269, %v1269
        %v1272 = vsel %vm646, %v1271, 0.0
        %1273 = vadd.xlane.f32.xlu0 %v1272
        %v1274 = vpop.xlane.xlu0 %1273
        %v1275 = vmul.f32 %v1274, %v650
        %v1276 = vadd.f32 %v1275, 1e-06
        %v1277 = vrsqrt.pop %v1276
        %v1278 = vmul.f32 %v1269, %v1277
        %v1280 = vlaneseq
        %v1281 = vshrl.u32 %v1280, 7
        %v1282 = vsub.s32 0, %v1281
        %v1283 = vrot.slane %v1270, %v1282
        %v1285 = vmul.f32 %v1278, %v1283
        %v1286 = vld [vmem:[%s561] sm:$0xf]
        %v1287 = vld [vmem:[%s561 + $0x4] sm:$0xf]
        %v1288 = vld [vmem:[%s561 + $0x8] sm:$0xf]
        %v1289 = vld [vmem:[%s561 + $0xc] sm:$0xf]
        %v1290 = vpack.c.bf16 %v1285, %v1285
        %v1295 = vunpack.c.l.b16 %v1286
        %v1296 = vunpack.c.l.b16 %v1287
        %v1297 = vunpack.c.l.b16 %v1288
        %v1298 = vunpack.c.l.b16 %v1289
        %v1299 = vpack.c.b16 %v1296, %v1295
        %v1300 = vpack.c.b16 %v1298, %v1297
        %v1304 = vsel %vm646, %v1290, 0
        %1306 = vmatprep.subr.bf16.mxu0 0
        %1307 = vmatpush1.bf16.msra.mxu0 %v1299
        %1308 = vmatprep.subr.bf16.mxu0 0
        %1309 = vmatpush1.bf16.msra.mxu0 %v1300
        %1310 = vmatprep.subr.bf16.mxu0 0
        %1311 = vmatpush1.bf16.msra.mxu0 0
        %1312 = vmatprep.subr.bf16.mxu0 0
        %1313 = vmatpush1.bf16.msra.mxu0 0
        %1314 = vmatprep.subr.bf16.mxu0 0
        %1315 = vmatpush1.bf16.msra.mxu0 0
        %1316 = vmatprep.subr.bf16.mxu0 0
        %1317 = vmatpush1.bf16.msra.mxu0 0
        %1318 = vmatprep.subr.bf16.mxu0 0
        %1319 = vmatpush1.bf16.msra.mxu0 0
        %1320 = vmatprep.subr.bf16.mxu0 0
        %1321 = vmatpush1.bf16.msra.mxu0 0
        %1322 = vmatprep.subr.bf16.mxu0 0
        %1323 = vmatpush1.bf16.msra.mxu0 0
        %1324 = vmatprep.subr.bf16.mxu0 0
        %1325 = vmatpush1.bf16.msra.mxu0 0
        %1326 = vmatprep.subr.bf16.mxu0 0
        %1327 = vmatpush1.bf16.msra.mxu0 0
        %1328 = vmatprep.subr.bf16.mxu0 0
        %1329 = vmatpush1.bf16.msra.mxu0 0
        %1330 = vmatprep.subr.bf16.mxu0 0
        %1331 = vmatpush1.bf16.msra.mxu0 0
        %1332 = vmatprep.subr.bf16.mxu0 0
        %1333 = vmatpush1.bf16.msra.mxu0 0
        %1334 = vmatprep.subr.bf16.mxu0 0
        %1335 = vmatpush1.bf16.msra.mxu0 0
        %1336 = vmatprep.subr.bf16.mxu0 0
        %1337 = vmatpush1.bf16.msra.mxu0 0
        %1338 = vmatprep.mubr.bf16.mxu0 0
        %1339 = vmatmul.mubr.bf16.gmra.mrb[0].mxu0 %v1304
        %v1340 = vpop.f32.mrb[0].mxu0
        %v1341 = vadd.f32 0.0, %v1340
        %v1342 = vpop.f32.mrb[0].mxu0
        %v1343 = vpop.f32.mrb[0].mxu0
        %v1344 = vpop.f32.mrb[0].mxu0
        %1345 = vdwg.mxu0
        %v1346 = vxor.u32 %v1341, 2147483648
        %v1347 = vmul.f32 %v1346, 1.442695
        %v1348 = vpow.pop %v1347
        %v1349 = vadd.f32 %v1348, 1.0
        %v1350 = vrcp.pop %v1349
        %v1351 = vmul.f32 1.0, %v1350
        %v1352 = vmul.f32 %v1341, %v1351
        %v1353 = vld [vmem:[%s570] sm:$0xf]
        %v1354 = vld [vmem:[%s570 + $0x4] sm:$0xf]
        %v1355 = vld [vmem:[%s570 + $0x8] sm:$0xf]
        %v1356 = vld [vmem:[%s570 + $0xc] sm:$0xf]
        %v1357 = vld [vmem:[%s570 + $0x10] sm:$0xf]
        %v1358 = vld [vmem:[%s570 + $0x14] sm:$0xf]
        %v1359 = vld [vmem:[%s570 + $0x18] sm:$0xf]
        %v1360 = vld [vmem:[%s570 + $0x1c] sm:$0xf]
        %v1361 = vld [vmem:[%s570 + $0x20] sm:$0xf]
        %v1362 = vld [vmem:[%s570 + $0x24] sm:$0xf]
        %v1363 = vld [vmem:[%s570 + $0x28] sm:$0xf]
        %v1364 = vld [vmem:[%s570 + $0x2c] sm:$0xf]
        %v1365 = vld [vmem:[%s570 + $0x30] sm:$0xf]
        %v1366 = vld [vmem:[%s570 + $0x34] sm:$0xf]
        %v1367 = vld [vmem:[%s570 + $0x38] sm:$0xf]
        %v1368 = vld [vmem:[%s570 + $0x3c] sm:$0xf]
        %v1369 = vpack.c.bf16 %v1352, %v1352
        %v1386 = vunpack.c.l.b16 %v1353
        %v1387 = vunpack.c.l.b16 %v1354
        %v1388 = vunpack.c.l.b16 %v1355
        %v1389 = vunpack.c.l.b16 %v1356
        %v1390 = vunpack.c.l.b16 %v1357
        %v1391 = vunpack.c.l.b16 %v1358
        %v1392 = vunpack.c.l.b16 %v1359
        %v1393 = vunpack.c.l.b16 %v1360
        %v1394 = vunpack.c.l.b16 %v1361
        %v1395 = vunpack.c.l.b16 %v1362
        %v1396 = vunpack.c.l.b16 %v1363
        %v1397 = vunpack.c.l.b16 %v1364
        %v1398 = vunpack.c.l.b16 %v1365
        %v1399 = vunpack.c.l.b16 %v1366
        %v1400 = vunpack.c.l.b16 %v1367
        %v1401 = vunpack.c.l.b16 %v1368
        %v1402 = vpack.c.b16 %v1387, %v1386
        %v1403 = vpack.c.b16 %v1389, %v1388
        %v1404 = vpack.c.b16 %v1391, %v1390
        %v1405 = vpack.c.b16 %v1393, %v1392
        %v1406 = vpack.c.b16 %v1395, %v1394
        %v1407 = vpack.c.b16 %v1397, %v1396
        %v1408 = vpack.c.b16 %v1399, %v1398
        %v1409 = vpack.c.b16 %v1401, %v1400
        %1418 = vmatprep.subr.bf16.mxu0 0
        %1419 = vmatpush1.bf16.msra.mxu0 %v1402
        %1420 = vmatprep.subr.bf16.mxu0 0
        %1421 = vmatpush1.bf16.msra.mxu0 %v1403
        %1422 = vmatprep.subr.bf16.mxu0 0
        %1423 = vmatpush1.bf16.msra.mxu0 %v1404
        %1424 = vmatprep.subr.bf16.mxu0 0
        %1425 = vmatpush1.bf16.msra.mxu0 %v1405
        %1426 = vmatprep.subr.bf16.mxu0 0
        %1427 = vmatpush1.bf16.msra.mxu0 %v1406
        %1428 = vmatprep.subr.bf16.mxu0 0
        %1429 = vmatpush1.bf16.msra.mxu0 %v1407
        %1430 = vmatprep.subr.bf16.mxu0 0
        %1431 = vmatpush1.bf16.msra.mxu0 %v1408
        %1432 = vmatprep.subr.bf16.mxu0 0
        %1433 = vmatpush1.bf16.msra.mxu0 %v1409
        %1434 = vmatprep.subr.bf16.mxu0 0
        %1435 = vmatpush1.bf16.msra.mxu0 0
        %1436 = vmatprep.subr.bf16.mxu0 0
        %1437 = vmatpush1.bf16.msra.mxu0 0
        %1438 = vmatprep.subr.bf16.mxu0 0
        %1439 = vmatpush1.bf16.msra.mxu0 0
        %1440 = vmatprep.subr.bf16.mxu0 0
        %1441 = vmatpush1.bf16.msra.mxu0 0
        %1442 = vmatprep.subr.bf16.mxu0 0
        %1443 = vmatpush1.bf16.msra.mxu0 0
        %1444 = vmatprep.subr.bf16.mxu0 0
        %1445 = vmatpush1.bf16.msra.mxu0 0
        %1446 = vmatprep.subr.bf16.mxu0 0
        %1447 = vmatpush1.bf16.msra.mxu0 0
        %1448 = vmatprep.subr.bf16.mxu0 0
        %1449 = vmatpush1.bf16.msra.mxu0 0
        %1450 = vmatprep.mubr.bf16.mxu0 0
        %1451 = vmatmul.mubr.bf16.gmra.mrb[0].mxu0 %v1369
        %v1452 = vpop.f32.mrb[0].mxu0
        %v1453 = vadd.f32 0.0, %v1452
        %v1454 = vpop.f32.mrb[0].mxu0
        %v1455 = vpop.f32.mrb[0].mxu0
        %v1456 = vpop.f32.mrb[0].mxu0
        %1457 = vdwg.mxu0
        %v1458 = vadd.f32 %v1269, %v1453
        %1459 = vst.msk [vmem:[%s634] sm:$0xff] %vm646, %v1458
        %s1460 = sand.u32 %s294, 1
        %s1461 = scalar_lea.sflag [#allocation5], %s1460
        %s1462 = sand.u32 %s294, 1
        %s1463 = smul.addr %s1462, 8
        %s1464 = scalar_lea.vmem [#allocation17], %s1463
        // Predicated region
        $region105: #{base_transformer_forward.1} parent=59 // pred_check
          %p1465 = pneg %p304
        $region106: #{base_transformer_forward.1} parent=59 // pred_check_branch
          %1467 = sbr.rel (%p1465) target = $region108
        $region107: #{base_transformer_forward.1} parent=59 // pred_region
          %s1469 = ssub.s32 128, 128
          %1470 = vsyncadd %s1461, %s1469
          %s1471 = smul.addr %s33, 128
          %s1472 = scalar_lea.hbm %s10, %s1471
          %s1474 = sshll.u32 %s1464, 4
          %s1475 = int_to_ptr.vmem [resolvable:$true] %s1474
          %1477 = dma.vmem_to_hbm [thread:$0]  %s1475, 128, %s1472, %s1461
        $region108: #{base_transformer_forward.1} parent=59 // pred_fallthru
          _
      $region60: #{base_transformer_forward.1} parent=5 // pred_fallthru
        _
      %p1478 = scmp.le.s32.totalorder 2, %s24
      // Predicated region
      $region109: #{base_transformer_forward.1} parent=5 // pred_check
        %p1479 = pneg %p1478
      $region110: #{base_transformer_forward.1} parent=5 // pred_check_branch
        %1481 = sbr.rel (%p1479) target = $region112
      $region111: #{base_transformer_forward.1} parent=5 // pred_region
        %s1482 = ssub.s32 %s24, 2
        // Predicated region
        $region113: #{base_transformer_forward.1} parent=111 // pred_check
          %p1483 = pneg %p310
        $region114: #{base_transformer_forward.1} parent=111 // pred_check_branch
          %1485 = sbr.rel (%p1483) target = $region116
        $region115: #{base_transformer_forward.1} parent=111 // pred_region
          %s1486 = sand.u32 %s295, 1
          %s1487 = scalar_lea.sflag [#allocation5], %s1486
          %s1488 = sand.u32 %s295, 1
          %s1489 = smul.addr %s1488, 8
          %s1490 = scalar_lea.vmem [#allocation17], %s1489
          %1491 = dma.done %s1487, 128
        $region116: #{base_transformer_forward.1} parent=111 // pred_fallthru
          _
      $region112: #{base_transformer_forward.1} parent=5 // pred_fallthru
        _
    $region6: #{base_transformer_forward.1} parent=1 // loop_footer
      %s28 = sadd.s32 1, %s24
    $region7: #{base_transformer_forward.1} parent=1 // loop_footer_branch
      %23 = sbr.rel target = $region3
    $region8: #{base_transformer_forward.1} parent=1 // loop_exit
      _
    %1492 = vsyncpa [#allocation4], 1
    %s1493 = scalar_lea.sflag [#allocation4], 1
    %1494 = vsyncpa %s1493, 1
    %1495 = vsyncpa [#allocation7], 1
    %1496 = vsyncpa [#allocation10], 1
    %1497 = vsyncpa [#allocation5], 1
    %s1498 = scalar_lea.sflag [#allocation5], 1
    %1499 = vsyncpa %s1498, 1

</llo_original>
